<compile_context>
chip_gen: v6e
topology: v6e:2x2x1
jax: 0.10.0
libtpu: 0.0.40
codegen_flags: <defaults>
</compile_context>

<pallas_src>
import functools

import jax
import jax.numpy as jnp
from jax.experimental import pallas as pl
from jax.experimental.pallas import tpu as pltpu

K = 7       # conv kernel size
P = 3       # "same" padding
SUB = 8     # f32 sublane rows per compute chunk
LANE = 128  # lane width


def _conv7x7_sigmoid(s, m, w_ref, b_ref, hmask_ref, wmask_ref, W):
    """7x7 'same' conv over the 2-channel (sum, max) features + sigmoid.

    s, m        : (SUB, HW) f32 (channel sum / channel max, flattened spatial)
    w_ref       : SMEM (2*K*K,) f32, order (c, kh, kw); channel-0 pre-scaled 1/C
    b_ref       : SMEM (1,) f32
    hmask_ref   : VMEM (K, SUB, HW) row-validity masks
    wmask_ref   : VMEM (K, SUB, HW) column-validity masks
    returns     : (SUB, HW) f32 attention map
    """
    HW = s.shape[-1]
    feats = (s, m)

    # Per-kw partial sums: S[kw][i] = sum_{c,kh} w[c,kh,kw] * band_{c,kh}[i]
    S = [None] * K
    for kh in range(K):
        dh = kh - P
        # Load the row mask once per kh and reuse it for both channels
        # (no broadcast_in_dim in the hot loop: masks are pre-broadcast).
        hrow = hmask_ref[kh] if dh != 0 else None
        for c in range(2):
            band = feats[c]
            if dh != 0:
                # band[i] = feat[i + dh*W], masked to valid rows (output coords)
                band = pltpu.roll(band, (-dh * W) % HW, axis=1) * hrow
            base = c * K * K + kh * K
            for kw in range(K):
                contrib = w_ref[base + kw] * band
                S[kw] = contrib if S[kw] is None else S[kw] + contrib

    # Apply the column (lane) shift + column border mask once per kw.
    acc = None
    for kw in range(K):
        dw = kw - P
        t = S[kw]
        if dw != 0:
            t = pltpu.roll(t, (-dw) % HW, axis=1) * wmask_ref[kw]
        acc = t if acc is None else acc + t

    acc = acc + b_ref[0]
    # sigmoid = 1 / (1 + exp(-x)); exp goes to the EUP.  approx=True would
    # also push the reciprocal onto the EUP but costs ~1e-4 abs error.
    return pl.reciprocal(1.0 + jnp.exp(-acc), approx=False)


def _spatial_attn_kernel(x_ref, w_ref, b_ref, hmask_ref, wmask_ref, o_ref,
                         sum_scr=None, max_scr=None, *, W, c_tile, sub):
    # x_ref     : VMEM (bn, c_tile*HW)   channels folded into the lane axis
    # o_ref     : VMEM (bn, HW)          dense 2-D output block
    # sum/max_scr: VMEM (bn, HW) f32     running channel sum/max (only when the
    #                                    channel dim is tiled across the grid)
    multi_c = sum_scr is not None
    bn = o_ref.shape[0]
    HW = o_ref.shape[-1]

    if multi_c:
        c_idx = pl.program_id(1)
        n_c = pl.num_programs(1)

        @pl.when(c_idx == 0)
        def _():
            sum_scr[...] = jnp.zeros_like(sum_scr)
            max_scr[...] = jnp.full(max_scr.shape, -jnp.inf, jnp.float32)

    # Process the block in 8-row sublane chunks to bound the live set of the
    # 7 per-kw conv accumulators.
    for ci in range(bn // sub):
        rows = slice(ci * sub, (ci + 1) * sub)

        # Fused channel sum & max over aligned lane slices (one channel load
        # per iteration -- no sublane extraction, no slab-sized live value).
        x0 = x_ref[rows, 0:HW].astype(jnp.float32)
        s, m = x0, x0
        for c in range(1, c_tile):
            xc = x_ref[rows, c * HW:(c + 1) * HW].astype(jnp.float32)
            s = s + xc
            m = jnp.maximum(m, xc)

        if multi_c:
            s = s + sum_scr[rows, :]
            m = jnp.maximum(m, max_scr[rows, :])

            @pl.when(c_idx < n_c - 1)
            def _():
                sum_scr[rows, :] = s
                max_scr[rows, :] = m

            @pl.when(c_idx == n_c - 1)
            def _():
                o_ref[rows, :] = _conv7x7_sigmoid(
                    s, m, w_ref, b_ref, hmask_ref, wmask_ref, W
                ).astype(o_ref.dtype)
        else:
            o_ref[rows, :] = _conv7x7_sigmoid(
                s, m, w_ref, b_ref, hmask_ref, wmask_ref, W
            ).astype(o_ref.dtype)


def spatial_attention(x, weight, bias, *, c_tile=None):
    """x: (N, C, H, W); weight: (1, 2, 7, 7); bias: (1,) -> (N, 1, H, W)."""
    N, C, H, W = x.shape
    HW = H * W
    HW_pad = ((HW + LANE - 1) // LANE) * LANE
    N_pad = ((N + SUB - 1) // SUB) * SUB
    itemsize = x.dtype.itemsize

    # Fold the 1/C of the channel mean into the channel-0 conv weights
    # (conv is linear; bias stays outside and is untouched).
    w = weight.astype(jnp.float32).reshape(2, K, K)
    w = w.at[0].multiply(1.0 / C)
    w_flat = w.reshape(-1)                       # (2*K*K,), order: c, kh, kw
    b = bias.astype(jnp.float32).reshape(1)

    # "Same"-padding border masks on the flattened (lane) spatial axis,
    # pre-broadcast over the 8-row sublane chunk so the kernel never emits
    # broadcast_in_dim in the tap loop.
    ii = jnp.arange(HW_pad, dtype=jnp.int32)
    hh, ww = ii // W, ii % W
    hmask = jnp.stack(
        [((hh + (kh - P) >= 0) & (hh + (kh - P) < H)).astype(jnp.float32)
         for kh in range(K)])                    # (K, HW_pad)
    wmask = jnp.stack(
        [((ww + (kw - P) >= 0) & (ww + (kw - P) < W)).astype(jnp.float32)
         for kw in range(K)])                    # (K, HW_pad)
    hmask_b = jnp.broadcast_to(hmask[:, None, :], (K, SUB, HW_pad))
    wmask_b = jnp.broadcast_to(wmask[:, None, :], (K, SUB, HW_pad))

    # Lane/sublane-dense layout: pad spatial to a multiple of 128 and batch to
    # a multiple of 8, then fold channels into the lane axis so channel slices
    # are aligned 128-multiple lane slices.
    x_flat = x.reshape(N, C, HW)
    if HW_pad != HW:
        x_flat = jnp.pad(x_flat, ((0, 0), (0, 0), (0, HW_pad - HW)))
    if N_pad != N:
        x_flat = jnp.pad(x_flat, ((0, N_pad - N), (0, 0), (0, 0)))
    x2d = x_flat.reshape(N_pad, C * HW_pad)

    BUDGET = 6 << 20   # double-buffered input-block byte budget

    # Channel tile: keeps the streamed block bounded for production C*H*W
    # (v7x has 64 MiB VMEM / 32 MiB default scoped budget).
    if c_tile is None:
        c_tile = C
        while c_tile > 1 and 2 * SUB * c_tile * HW_pad * itemsize > BUDGET:
            c_tile -= 1
            while C % c_tile:
                c_tile -= 1
    assert C % c_tile == 0
    n_ct = C // c_tile

    # Batch tile: multiple of 8 sublanes, large enough to amortize the
    # ~0.35us/step pipeline overhead, but keeping >=2 grid steps whenever
    # possible so the "parallel" batch axis can be sharded across TensorCores.
    bn = SUB
    for cand in range(min(N_pad, 64), SUB - 1, -SUB):
        if N_pad % cand:
            continue
        if 2 * cand * c_tile * HW_pad * itemsize > BUDGET:
            continue
        if N_pad // cand < 2 and N_pad >= 2 * SUB:
            continue
        bn = cand
        break

    kernel = functools.partial(_spatial_attn_kernel, W=W, c_tile=c_tile, sub=SUB)

    scratch = ()
    if n_ct > 1:
        scratch = (pltpu.VMEM((bn, HW_pad), jnp.float32),
                   pltpu.VMEM((bn, HW_pad), jnp.float32))

    # Scoped-VMEM estimate with headroom (never below the 32 MiB default).
    vmem_est = (2 * bn * c_tile * HW_pad * itemsize       # input (2 buffers)
                + 2 * bn * HW_pad * itemsize               # output (2 buffers)
                + 2 * 2 * K * SUB * HW_pad * 4              # masks (2 buffers)
                + 2 * bn * HW_pad * 4)                      # sum/max scratch
    vmem_limit = int(max(32 << 20, min(2 * vmem_est, 100 << 20)))

    out = pl.pallas_call(
        kernel,
        out_shape=jax.ShapeDtypeStruct((N_pad, HW_pad), x.dtype),
        grid_spec=pltpu.PrefetchScalarGridSpec(
            num_scalar_prefetch=0,
            grid=(N_pad // bn, n_ct),
            in_specs=[
                pl.BlockSpec((bn, c_tile * HW_pad), lambda n, c: (n, c)),
                pl.BlockSpec(memory_space=pltpu.MemorySpace.SMEM),
                pl.BlockSpec(memory_space=pltpu.MemorySpace.SMEM),
                pl.BlockSpec((K, SUB, HW_pad), lambda n, c: (0, 0, 0)),
                pl.BlockSpec((K, SUB, HW_pad), lambda n, c: (0, 0, 0)),
            ],
            out_specs=pl.BlockSpec((bn, HW_pad), lambda n, c: (n, 0)),
            scratch_shapes=scratch,
        ),
        compiler_params=pltpu.CompilerParams(
            dimension_semantics=("parallel", "arbitrary"),
            vmem_limit_bytes=vmem_limit),
    )(x2d, w_flat, b, hmask_b, wmask_b)

    return out[:N, :HW].reshape(N, 1, H, W)


def _reference(x, weight, bias):
    avg = jnp.mean(x, axis=1, keepdims=True)
    mx = jnp.max(x, axis=1, keepdims=True)
    feat = jnp.concatenate([avg, mx], axis=1)                    # (N, 2, H, W)
    out = jax.lax.conv_general_dilated(
        feat, weight, window_strides=(1, 1), padding=[(P, P), (P, P)],
        dimension_numbers=("NCHW", "OIHW", "NCHW"))
    out = out + bias.reshape(1, 1, 1, 1)
    return jax.nn.sigmoid(out)


if __name__ == "__main__":
    key = jax.random.PRNGKey(0)
    kx, kw_key, kb_key = jax.random.split(key, 3)

    N, C, H, W = 2, 4, 16, 16
    x = jax.random.normal(kx, (N, C, H, W), dtype=jnp.float32)

    # deterministic Conv2d(2, 1, 7, padding=3) params (PyTorch-style uniform init)
    fan_in = 2 * K * K
    bound = 1.0 / (fan_in ** 0.5)
    weight = jax.random.uniform(kw_key, (1, 2, K, K), jnp.float32, -bound, bound)
    bias = jax.random.uniform(kb_key, (1,), jnp.float32, -bound, bound)

    ref = _reference(x, weight, bias)

    # Single-channel-tile path (the common case).
    out = jax.block_until_ready(spatial_attention(x, weight, bias))
    assert out.shape == (N, 1, H, W)
    err = jnp.max(jnp.abs(out - ref))
    assert jnp.allclose(out, ref, atol=1e-5, rtol=1e-5), f"max err {err}"

    # Channel-tiled path (running sum/max scratch across an "arbitrary" C axis).
    out2 = jax.block_until_ready(spatial_attention(x, weight, bias, c_tile=2))
    err2 = jnp.max(jnp.abs(out2 - ref))
    assert jnp.allclose(out2, ref, atol=1e-5, rtol=1e-5), f"max err {err2}"

    print("KERNEL_OK")
</pallas_src>

<mosaic_0001>
module attributes {stable_mosaic.version = 11 : i64} {
  func.func @_spatial_attn_kernel(%arg0: i32, %arg1: i32, %arg2: memref<8x1024xf32, #tpu.memory_space<vmem>>, %arg3: memref<98xf32, #tpu.memory_space<smem>>, %arg4: memref<1xf32, #tpu.memory_space<smem>>, %arg5: memref<7x8x256xf32, #tpu.memory_space<vmem>>, %arg6: memref<7x8x256xf32, #tpu.memory_space<vmem>>, %arg7: memref<8x256xf32, #tpu.memory_space<vmem>>) attributes {dimension_semantics = [#tpu.dimension_semantics<parallel>, #tpu.dimension_semantics<arbitrary>], iteration_bounds = array<i64: 1, 1>, scalar_prefetch = 0 : i64, scratch_operands = 0 : i64, tpu.core_type = #tpu.core_type<tc>, window_params = [{transform_indices = @transform_0, window_bounds = array<i64: 8, 1024>}, {transform_indices = @transform_1, window_bounds = array<i64: 98>}, {transform_indices = @transform_2, window_bounds = array<i64: 1>}, {pipeline_mode = #tpu.pipeline_mode<synchronous>, transform_indices = @transform_3, window_bounds = array<i64: 7, 8, 256>}, {pipeline_mode = #tpu.pipeline_mode<synchronous>, transform_indices = @transform_4, window_bounds = array<i64: 7, 8, 256>}, {transform_indices = @transform_5, window_bounds = array<i64: 8, 256>}]} {
    %c0 = arith.constant 0 : index
    %c0_0 = arith.constant 0 : index
    %0 = vector.load %arg2[%c0, %c0_0] : memref<8x1024xf32, #tpu.memory_space<vmem>>, vector<8x256xf32>
    %c0_1 = arith.constant 0 : index
    %c256 = arith.constant 256 : index
    %1 = vector.load %arg2[%c0_1, %c256] : memref<8x1024xf32, #tpu.memory_space<vmem>>, vector<8x256xf32>
    %2 = arith.addf %0, %1 : vector<8x256xf32>
    %3 = arith.maximumf %0, %1 : vector<8x256xf32>
    %c0_2 = arith.constant 0 : index
    %c512 = arith.constant 512 : index
    %4 = vector.load %arg2[%c0_2, %c512] : memref<8x1024xf32, #tpu.memory_space<vmem>>, vector<8x256xf32>
    %5 = arith.addf %2, %4 : vector<8x256xf32>
    %6 = arith.maximumf %3, %4 : vector<8x256xf32>
    %c0_3 = arith.constant 0 : index
    %c768 = arith.constant 768 : index
    %7 = vector.load %arg2[%c0_3, %c768] : memref<8x1024xf32, #tpu.memory_space<vmem>>, vector<8x256xf32>
    %8 = arith.addf %5, %7 : vector<8x256xf32>
    %9 = arith.maximumf %6, %7 : vector<8x256xf32>
    %c0_4 = arith.constant 0 : index
    %c0_5 = arith.constant 0 : index
    %c0_6 = arith.constant 0 : index
    %10 = vector.load %arg5[%c0_4, %c0_5, %c0_6] : memref<7x8x256xf32, #tpu.memory_space<vmem>>, vector<1x8x256xf32>
    %11 = vector.shape_cast %10 : vector<1x8x256xf32> to vector<8x256xf32>
    %c48_i32 = arith.constant 48 : i32
    %12 = tpu.dynamic_rotate %8 by %c48_i32 dim 1 : vector<8x256xf32>, i32 -> vector<8x256xf32>
    %13 = arith.mulf %12, %11 : vector<8x256xf32>
    %c0_7 = arith.constant 0 : index
    %14 = memref.load %arg3[%c0_7] : memref<98xf32, #tpu.memory_space<smem>>
    %15 = vector.broadcast %14 : f32 to vector<8x256xf32>
    %16 = arith.mulf %15, %13 : vector<8x256xf32>
    %c1 = arith.constant 1 : index
    %17 = memref.load %arg3[%c1] : memref<98xf32, #tpu.memory_space<smem>>
    %18 = vector.broadcast %17 : f32 to vector<8x256xf32>
    %19 = arith.mulf %18, %13 : vector<8x256xf32>
    %c2 = arith.constant 2 : index
    %20 = memref.load %arg3[%c2] : memref<98xf32, #tpu.memory_space<smem>>
    %21 = vector.broadcast %20 : f32 to vector<8x256xf32>
    %22 = arith.mulf %21, %13 : vector<8x256xf32>
    %c3 = arith.constant 3 : index
    %23 = memref.load %arg3[%c3] : memref<98xf32, #tpu.memory_space<smem>>
    %24 = vector.broadcast %23 : f32 to vector<8x256xf32>
    %25 = arith.mulf %24, %13 : vector<8x256xf32>
    %c4 = arith.constant 4 : index
    %26 = memref.load %arg3[%c4] : memref<98xf32, #tpu.memory_space<smem>>
    %27 = vector.broadcast %26 : f32 to vector<8x256xf32>
    %28 = arith.mulf %27, %13 : vector<8x256xf32>
    %c5 = arith.constant 5 : index
    %29 = memref.load %arg3[%c5] : memref<98xf32, #tpu.memory_space<smem>>
    %30 = vector.broadcast %29 : f32 to vector<8x256xf32>
    %31 = arith.mulf %30, %13 : vector<8x256xf32>
    %c6 = arith.constant 6 : index
    %32 = memref.load %arg3[%c6] : memref<98xf32, #tpu.memory_space<smem>>
    %33 = vector.broadcast %32 : f32 to vector<8x256xf32>
    %34 = arith.mulf %33, %13 : vector<8x256xf32>
    %c48_i32_8 = arith.constant 48 : i32
    %35 = tpu.dynamic_rotate %9 by %c48_i32_8 dim 1 : vector<8x256xf32>, i32 -> vector<8x256xf32>
    %36 = arith.mulf %35, %11 : vector<8x256xf32>
    %c49 = arith.constant 49 : index
    %37 = memref.load %arg3[%c49] : memref<98xf32, #tpu.memory_space<smem>>
    %38 = vector.broadcast %37 : f32 to vector<8x256xf32>
    %39 = arith.mulf %38, %36 : vector<8x256xf32>
    %40 = arith.addf %16, %39 : vector<8x256xf32>
    %c50 = arith.constant 50 : index
    %41 = memref.load %arg3[%c50] : memref<98xf32, #tpu.memory_space<smem>>
    %42 = vector.broadcast %41 : f32 to vector<8x256xf32>
    %43 = arith.mulf %42, %36 : vector<8x256xf32>
    %44 = arith.addf %19, %43 : vector<8x256xf32>
    %c51 = arith.constant 51 : index
    %45 = memref.load %arg3[%c51] : memref<98xf32, #tpu.memory_space<smem>>
    %46 = vector.broadcast %45 : f32 to vector<8x256xf32>
    %47 = arith.mulf %46, %36 : vector<8x256xf32>
    %48 = arith.addf %22, %47 : vector<8x256xf32>
    %c52 = arith.constant 52 : index
    %49 = memref.load %arg3[%c52] : memref<98xf32, #tpu.memory_space<smem>>
    %50 = vector.broadcast %49 : f32 to vector<8x256xf32>
    %51 = arith.mulf %50, %36 : vector<8x256xf32>
    %52 = arith.addf %25, %51 : vector<8x256xf32>
    %c53 = arith.constant 53 : index
    %53 = memref.load %arg3[%c53] : memref<98xf32, #tpu.memory_space<smem>>
    %54 = vector.broadcast %53 : f32 to vector<8x256xf32>
    %55 = arith.mulf %54, %36 : vector<8x256xf32>
    %56 = arith.addf %28, %55 : vector<8x256xf32>
    %c54 = arith.constant 54 : index
    %57 = memref.load %arg3[%c54] : memref<98xf32, #tpu.memory_space<smem>>
    %58 = vector.broadcast %57 : f32 to vector<8x256xf32>
    %59 = arith.mulf %58, %36 : vector<8x256xf32>
    %60 = arith.addf %31, %59 : vector<8x256xf32>
    %c55 = arith.constant 55 : index
    %61 = memref.load %arg3[%c55] : memref<98xf32, #tpu.memory_space<smem>>
    %62 = vector.broadcast %61 : f32 to vector<8x256xf32>
    %63 = arith.mulf %62, %36 : vector<8x256xf32>
    %64 = arith.addf %34, %63 : vector<8x256xf32>
    %c1_9 = arith.constant 1 : index
    %c0_10 = arith.constant 0 : index
    %c0_11 = arith.constant 0 : index
    %65 = vector.load %arg5[%c1_9, %c0_10, %c0_11] : memref<7x8x256xf32, #tpu.memory_space<vmem>>, vector<1x8x256xf32>
    %66 = vector.shape_cast %65 : vector<1x8x256xf32> to vector<8x256xf32>
    %c32_i32 = arith.constant 32 : i32
    %67 = tpu.dynamic_rotate %8 by %c32_i32 dim 1 : vector<8x256xf32>, i32 -> vector<8x256xf32>
    %68 = arith.mulf %67, %66 : vector<8x256xf32>
    %c7 = arith.constant 7 : index
    %69 = memref.load %arg3[%c7] : memref<98xf32, #tpu.memory_space<smem>>
    %70 = vector.broadcast %69 : f32 to vector<8x256xf32>
    %71 = arith.mulf %70, %68 : vector<8x256xf32>
    %72 = arith.addf %40, %71 : vector<8x256xf32>
    %c8 = arith.constant 8 : index
    %73 = memref.load %arg3[%c8] : memref<98xf32, #tpu.memory_space<smem>>
    %74 = vector.broadcast %73 : f32 to vector<8x256xf32>
    %75 = arith.mulf %74, %68 : vector<8x256xf32>
    %76 = arith.addf %44, %75 : vector<8x256xf32>
    %c9 = arith.constant 9 : index
    %77 = memref.load %arg3[%c9] : memref<98xf32, #tpu.memory_space<smem>>
    %78 = vector.broadcast %77 : f32 to vector<8x256xf32>
    %79 = arith.mulf %78, %68 : vector<8x256xf32>
    %80 = arith.addf %48, %79 : vector<8x256xf32>
    %c10 = arith.constant 10 : index
    %81 = memref.load %arg3[%c10] : memref<98xf32, #tpu.memory_space<smem>>
    %82 = vector.broadcast %81 : f32 to vector<8x256xf32>
    %83 = arith.mulf %82, %68 : vector<8x256xf32>
    %84 = arith.addf %52, %83 : vector<8x256xf32>
    %c11 = arith.constant 11 : index
    %85 = memref.load %arg3[%c11] : memref<98xf32, #tpu.memory_space<smem>>
    %86 = vector.broadcast %85 : f32 to vector<8x256xf32>
    %87 = arith.mulf %86, %68 : vector<8x256xf32>
    %88 = arith.addf %56, %87 : vector<8x256xf32>
    %c12 = arith.constant 12 : index
    %89 = memref.load %arg3[%c12] : memref<98xf32, #tpu.memory_space<smem>>
    %90 = vector.broadcast %89 : f32 to vector<8x256xf32>
    %91 = arith.mulf %90, %68 : vector<8x256xf32>
    %92 = arith.addf %60, %91 : vector<8x256xf32>
    %c13 = arith.constant 13 : index
    %93 = memref.load %arg3[%c13] : memref<98xf32, #tpu.memory_space<smem>>
    %94 = vector.broadcast %93 : f32 to vector<8x256xf32>
    %95 = arith.mulf %94, %68 : vector<8x256xf32>
    %96 = arith.addf %64, %95 : vector<8x256xf32>
    %c32_i32_12 = arith.constant 32 : i32
    %97 = tpu.dynamic_rotate %9 by %c32_i32_12 dim 1 : vector<8x256xf32>, i32 -> vector<8x256xf32>
    %98 = arith.mulf %97, %66 : vector<8x256xf32>
    %c56 = arith.constant 56 : index
    %99 = memref.load %arg3[%c56] : memref<98xf32, #tpu.memory_space<smem>>
    %100 = vector.broadcast %99 : f32 to vector<8x256xf32>
    %101 = arith.mulf %100, %98 : vector<8x256xf32>
    %102 = arith.addf %72, %101 : vector<8x256xf32>
    %c57 = arith.constant 57 : index
    %103 = memref.load %arg3[%c57] : memref<98xf32, #tpu.memory_space<smem>>
    %104 = vector.broadcast %103 : f32 to vector<8x256xf32>
    %105 = arith.mulf %104, %98 : vector<8x256xf32>
    %106 = arith.addf %76, %105 : vector<8x256xf32>
    %c58 = arith.constant 58 : index
    %107 = memref.load %arg3[%c58] : memref<98xf32, #tpu.memory_space<smem>>
    %108 = vector.broadcast %107 : f32 to vector<8x256xf32>
    %109 = arith.mulf %108, %98 : vector<8x256xf32>
    %110 = arith.addf %80, %109 : vector<8x256xf32>
    %c59 = arith.constant 59 : index
    %111 = memref.load %arg3[%c59] : memref<98xf32, #tpu.memory_space<smem>>
    %112 = vector.broadcast %111 : f32 to vector<8x256xf32>
    %113 = arith.mulf %112, %98 : vector<8x256xf32>
    %114 = arith.addf %84, %113 : vector<8x256xf32>
    %c60 = arith.constant 60 : index
    %115 = memref.load %arg3[%c60] : memref<98xf32, #tpu.memory_space<smem>>
    %116 = vector.broadcast %115 : f32 to vector<8x256xf32>
    %117 = arith.mulf %116, %98 : vector<8x256xf32>
    %118 = arith.addf %88, %117 : vector<8x256xf32>
    %c61 = arith.constant 61 : index
    %119 = memref.load %arg3[%c61] : memref<98xf32, #tpu.memory_space<smem>>
    %120 = vector.broadcast %119 : f32 to vector<8x256xf32>
    %121 = arith.mulf %120, %98 : vector<8x256xf32>
    %122 = arith.addf %92, %121 : vector<8x256xf32>
    %c62 = arith.constant 62 : index
    %123 = memref.load %arg3[%c62] : memref<98xf32, #tpu.memory_space<smem>>
    %124 = vector.broadcast %123 : f32 to vector<8x256xf32>
    %125 = arith.mulf %124, %98 : vector<8x256xf32>
    %126 = arith.addf %96, %125 : vector<8x256xf32>
    %c2_13 = arith.constant 2 : index
    %c0_14 = arith.constant 0 : index
    %c0_15 = arith.constant 0 : index
    %127 = vector.load %arg5[%c2_13, %c0_14, %c0_15] : memref<7x8x256xf32, #tpu.memory_space<vmem>>, vector<1x8x256xf32>
    %128 = vector.shape_cast %127 : vector<1x8x256xf32> to vector<8x256xf32>
    %c16_i32 = arith.constant 16 : i32
    %129 = tpu.dynamic_rotate %8 by %c16_i32 dim 1 : vector<8x256xf32>, i32 -> vector<8x256xf32>
    %130 = arith.mulf %129, %128 : vector<8x256xf32>
    %c14 = arith.constant 14 : index
    %131 = memref.load %arg3[%c14] : memref<98xf32, #tpu.memory_space<smem>>
    %132 = vector.broadcast %131 : f32 to vector<8x256xf32>
    %133 = arith.mulf %132, %130 : vector<8x256xf32>
    %134 = arith.addf %102, %133 : vector<8x256xf32>
    %c15 = arith.constant 15 : index
    %135 = memref.load %arg3[%c15] : memref<98xf32, #tpu.memory_space<smem>>
    %136 = vector.broadcast %135 : f32 to vector<8x256xf32>
    %137 = arith.mulf %136, %130 : vector<8x256xf32>
    %138 = arith.addf %106, %137 : vector<8x256xf32>
    %c16 = arith.constant 16 : index
    %139 = memref.load %arg3[%c16] : memref<98xf32, #tpu.memory_space<smem>>
    %140 = vector.broadcast %139 : f32 to vector<8x256xf32>
    %141 = arith.mulf %140, %130 : vector<8x256xf32>
    %142 = arith.addf %110, %141 : vector<8x256xf32>
    %c17 = arith.constant 17 : index
    %143 = memref.load %arg3[%c17] : memref<98xf32, #tpu.memory_space<smem>>
    %144 = vector.broadcast %143 : f32 to vector<8x256xf32>
    %145 = arith.mulf %144, %130 : vector<8x256xf32>
    %146 = arith.addf %114, %145 : vector<8x256xf32>
    %c18 = arith.constant 18 : index
    %147 = memref.load %arg3[%c18] : memref<98xf32, #tpu.memory_space<smem>>
    %148 = vector.broadcast %147 : f32 to vector<8x256xf32>
    %149 = arith.mulf %148, %130 : vector<8x256xf32>
    %150 = arith.addf %118, %149 : vector<8x256xf32>
    %c19 = arith.constant 19 : index
    %151 = memref.load %arg3[%c19] : memref<98xf32, #tpu.memory_space<smem>>
    %152 = vector.broadcast %151 : f32 to vector<8x256xf32>
    %153 = arith.mulf %152, %130 : vector<8x256xf32>
    %154 = arith.addf %122, %153 : vector<8x256xf32>
    %c20 = arith.constant 20 : index
    %155 = memref.load %arg3[%c20] : memref<98xf32, #tpu.memory_space<smem>>
    %156 = vector.broadcast %155 : f32 to vector<8x256xf32>
    %157 = arith.mulf %156, %130 : vector<8x256xf32>
    %158 = arith.addf %126, %157 : vector<8x256xf32>
    %c16_i32_16 = arith.constant 16 : i32
    %159 = tpu.dynamic_rotate %9 by %c16_i32_16 dim 1 : vector<8x256xf32>, i32 -> vector<8x256xf32>
    %160 = arith.mulf %159, %128 : vector<8x256xf32>
    %c63 = arith.constant 63 : index
    %161 = memref.load %arg3[%c63] : memref<98xf32, #tpu.memory_space<smem>>
    %162 = vector.broadcast %161 : f32 to vector<8x256xf32>
    %163 = arith.mulf %162, %160 : vector<8x256xf32>
    %164 = arith.addf %134, %163 : vector<8x256xf32>
    %c64 = arith.constant 64 : index
    %165 = memref.load %arg3[%c64] : memref<98xf32, #tpu.memory_space<smem>>
    %166 = vector.broadcast %165 : f32 to vector<8x256xf32>
    %167 = arith.mulf %166, %160 : vector<8x256xf32>
    %168 = arith.addf %138, %167 : vector<8x256xf32>
    %c65 = arith.constant 65 : index
    %169 = memref.load %arg3[%c65] : memref<98xf32, #tpu.memory_space<smem>>
    %170 = vector.broadcast %169 : f32 to vector<8x256xf32>
    %171 = arith.mulf %170, %160 : vector<8x256xf32>
    %172 = arith.addf %142, %171 : vector<8x256xf32>
    %c66 = arith.constant 66 : index
    %173 = memref.load %arg3[%c66] : memref<98xf32, #tpu.memory_space<smem>>
    %174 = vector.broadcast %173 : f32 to vector<8x256xf32>
    %175 = arith.mulf %174, %160 : vector<8x256xf32>
    %176 = arith.addf %146, %175 : vector<8x256xf32>
    %c67 = arith.constant 67 : index
    %177 = memref.load %arg3[%c67] : memref<98xf32, #tpu.memory_space<smem>>
    %178 = vector.broadcast %177 : f32 to vector<8x256xf32>
    %179 = arith.mulf %178, %160 : vector<8x256xf32>
    %180 = arith.addf %150, %179 : vector<8x256xf32>
    %c68 = arith.constant 68 : index
    %181 = memref.load %arg3[%c68] : memref<98xf32, #tpu.memory_space<smem>>
    %182 = vector.broadcast %181 : f32 to vector<8x256xf32>
    %183 = arith.mulf %182, %160 : vector<8x256xf32>
    %184 = arith.addf %154, %183 : vector<8x256xf32>
    %c69 = arith.constant 69 : index
    %185 = memref.load %arg3[%c69] : memref<98xf32, #tpu.memory_space<smem>>
    %186 = vector.broadcast %185 : f32 to vector<8x256xf32>
    %187 = arith.mulf %186, %160 : vector<8x256xf32>
    %188 = arith.addf %158, %187 : vector<8x256xf32>
    %c21 = arith.constant 21 : index
    %189 = memref.load %arg3[%c21] : memref<98xf32, #tpu.memory_space<smem>>
    %190 = vector.broadcast %189 : f32 to vector<8x256xf32>
    %191 = arith.mulf %190, %8 : vector<8x256xf32>
    %192 = arith.addf %164, %191 : vector<8x256xf32>
    %c22 = arith.constant 22 : index
    %193 = memref.load %arg3[%c22] : memref<98xf32, #tpu.memory_space<smem>>
    %194 = vector.broadcast %193 : f32 to vector<8x256xf32>
    %195 = arith.mulf %194, %8 : vector<8x256xf32>
    %196 = arith.addf %168, %195 : vector<8x256xf32>
    %c23 = arith.constant 23 : index
    %197 = memref.load %arg3[%c23] : memref<98xf32, #tpu.memory_space<smem>>
    %198 = vector.broadcast %197 : f32 to vector<8x256xf32>
    %199 = arith.mulf %198, %8 : vector<8x256xf32>
    %200 = arith.addf %172, %199 : vector<8x256xf32>
    %c24 = arith.constant 24 : index
    %201 = memref.load %arg3[%c24] : memref<98xf32, #tpu.memory_space<smem>>
    %202 = vector.broadcast %201 : f32 to vector<8x256xf32>
    %203 = arith.mulf %202, %8 : vector<8x256xf32>
    %204 = arith.addf %176, %203 : vector<8x256xf32>
    %c25 = arith.constant 25 : index
    %205 = memref.load %arg3[%c25] : memref<98xf32, #tpu.memory_space<smem>>
    %206 = vector.broadcast %205 : f32 to vector<8x256xf32>
    %207 = arith.mulf %206, %8 : vector<8x256xf32>
    %208 = arith.addf %180, %207 : vector<8x256xf32>
    %c26 = arith.constant 26 : index
    %209 = memref.load %arg3[%c26] : memref<98xf32, #tpu.memory_space<smem>>
    %210 = vector.broadcast %209 : f32 to vector<8x256xf32>
    %211 = arith.mulf %210, %8 : vector<8x256xf32>
    %212 = arith.addf %184, %211 : vector<8x256xf32>
    %c27 = arith.constant 27 : index
    %213 = memref.load %arg3[%c27] : memref<98xf32, #tpu.memory_space<smem>>
    %214 = vector.broadcast %213 : f32 to vector<8x256xf32>
    %215 = arith.mulf %214, %8 : vector<8x256xf32>
    %216 = arith.addf %188, %215 : vector<8x256xf32>
    %c70 = arith.constant 70 : index
    %217 = memref.load %arg3[%c70] : memref<98xf32, #tpu.memory_space<smem>>
    %218 = vector.broadcast %217 : f32 to vector<8x256xf32>
    %219 = arith.mulf %218, %9 : vector<8x256xf32>
    %220 = arith.addf %192, %219 : vector<8x256xf32>
    %c71 = arith.constant 71 : index
    %221 = memref.load %arg3[%c71] : memref<98xf32, #tpu.memory_space<smem>>
    %222 = vector.broadcast %221 : f32 to vector<8x256xf32>
    %223 = arith.mulf %222, %9 : vector<8x256xf32>
    %224 = arith.addf %196, %223 : vector<8x256xf32>
    %c72 = arith.constant 72 : index
    %225 = memref.load %arg3[%c72] : memref<98xf32, #tpu.memory_space<smem>>
    %226 = vector.broadcast %225 : f32 to vector<8x256xf32>
    %227 = arith.mulf %226, %9 : vector<8x256xf32>
    %228 = arith.addf %200, %227 : vector<8x256xf32>
    %c73 = arith.constant 73 : index
    %229 = memref.load %arg3[%c73] : memref<98xf32, #tpu.memory_space<smem>>
    %230 = vector.broadcast %229 : f32 to vector<8x256xf32>
    %231 = arith.mulf %230, %9 : vector<8x256xf32>
    %232 = arith.addf %204, %231 : vector<8x256xf32>
    %c74 = arith.constant 74 : index
    %233 = memref.load %arg3[%c74] : memref<98xf32, #tpu.memory_space<smem>>
    %234 = vector.broadcast %233 : f32 to vector<8x256xf32>
    %235 = arith.mulf %234, %9 : vector<8x256xf32>
    %236 = arith.addf %208, %235 : vector<8x256xf32>
    %c75 = arith.constant 75 : index
    %237 = memref.load %arg3[%c75] : memref<98xf32, #tpu.memory_space<smem>>
    %238 = vector.broadcast %237 : f32 to vector<8x256xf32>
    %239 = arith.mulf %238, %9 : vector<8x256xf32>
    %240 = arith.addf %212, %239 : vector<8x256xf32>
    %c76 = arith.constant 76 : index
    %241 = memref.load %arg3[%c76] : memref<98xf32, #tpu.memory_space<smem>>
    %242 = vector.broadcast %241 : f32 to vector<8x256xf32>
    %243 = arith.mulf %242, %9 : vector<8x256xf32>
    %244 = arith.addf %216, %243 : vector<8x256xf32>
    %c4_17 = arith.constant 4 : index
    %c0_18 = arith.constant 0 : index
    %c0_19 = arith.constant 0 : index
    %245 = vector.load %arg5[%c4_17, %c0_18, %c0_19] : memref<7x8x256xf32, #tpu.memory_space<vmem>>, vector<1x8x256xf32>
    %246 = vector.shape_cast %245 : vector<1x8x256xf32> to vector<8x256xf32>
    %c240_i32 = arith.constant 240 : i32
    %247 = tpu.dynamic_rotate %8 by %c240_i32 dim 1 : vector<8x256xf32>, i32 -> vector<8x256xf32>
    %248 = arith.mulf %247, %246 : vector<8x256xf32>
    %c28 = arith.constant 28 : index
    %249 = memref.load %arg3[%c28] : memref<98xf32, #tpu.memory_space<smem>>
    %250 = vector.broadcast %249 : f32 to vector<8x256xf32>
    %251 = arith.mulf %250, %248 : vector<8x256xf32>
    %252 = arith.addf %220, %251 : vector<8x256xf32>
    %c29 = arith.constant 29 : index
    %253 = memref.load %arg3[%c29] : memref<98xf32, #tpu.memory_space<smem>>
    %254 = vector.broadcast %253 : f32 to vector<8x256xf32>
    %255 = arith.mulf %254, %248 : vector<8x256xf32>
    %256 = arith.addf %224, %255 : vector<8x256xf32>
    %c30 = arith.constant 30 : index
    %257 = memref.load %arg3[%c30] : memref<98xf32, #tpu.memory_space<smem>>
    %258 = vector.broadcast %257 : f32 to vector<8x256xf32>
    %259 = arith.mulf %258, %248 : vector<8x256xf32>
    %260 = arith.addf %228, %259 : vector<8x256xf32>
    %c31 = arith.constant 31 : index
    %261 = memref.load %arg3[%c31] : memref<98xf32, #tpu.memory_space<smem>>
    %262 = vector.broadcast %261 : f32 to vector<8x256xf32>
    %263 = arith.mulf %262, %248 : vector<8x256xf32>
    %264 = arith.addf %232, %263 : vector<8x256xf32>
    %c32 = arith.constant 32 : index
    %265 = memref.load %arg3[%c32] : memref<98xf32, #tpu.memory_space<smem>>
    %266 = vector.broadcast %265 : f32 to vector<8x256xf32>
    %267 = arith.mulf %266, %248 : vector<8x256xf32>
    %268 = arith.addf %236, %267 : vector<8x256xf32>
    %c33 = arith.constant 33 : index
    %269 = memref.load %arg3[%c33] : memref<98xf32, #tpu.memory_space<smem>>
    %270 = vector.broadcast %269 : f32 to vector<8x256xf32>
    %271 = arith.mulf %270, %248 : vector<8x256xf32>
    %272 = arith.addf %240, %271 : vector<8x256xf32>
    %c34 = arith.constant 34 : index
    %273 = memref.load %arg3[%c34] : memref<98xf32, #tpu.memory_space<smem>>
    %274 = vector.broadcast %273 : f32 to vector<8x256xf32>
    %275 = arith.mulf %274, %248 : vector<8x256xf32>
    %276 = arith.addf %244, %275 : vector<8x256xf32>
    %c240_i32_20 = arith.constant 240 : i32
    %277 = tpu.dynamic_rotate %9 by %c240_i32_20 dim 1 : vector<8x256xf32>, i32 -> vector<8x256xf32>
    %278 = arith.mulf %277, %246 : vector<8x256xf32>
    %c77 = arith.constant 77 : index
    %279 = memref.load %arg3[%c77] : memref<98xf32, #tpu.memory_space<smem>>
    %280 = vector.broadcast %279 : f32 to vector<8x256xf32>
    %281 = arith.mulf %280, %278 : vector<8x256xf32>
    %282 = arith.addf %252, %281 : vector<8x256xf32>
    %c78 = arith.constant 78 : index
    %283 = memref.load %arg3[%c78] : memref<98xf32, #tpu.memory_space<smem>>
    %284 = vector.broadcast %283 : f32 to vector<8x256xf32>
    %285 = arith.mulf %284, %278 : vector<8x256xf32>
    %286 = arith.addf %256, %285 : vector<8x256xf32>
    %c79 = arith.constant 79 : index
    %287 = memref.load %arg3[%c79] : memref<98xf32, #tpu.memory_space<smem>>
    %288 = vector.broadcast %287 : f32 to vector<8x256xf32>
    %289 = arith.mulf %288, %278 : vector<8x256xf32>
    %290 = arith.addf %260, %289 : vector<8x256xf32>
    %c80 = arith.constant 80 : index
    %291 = memref.load %arg3[%c80] : memref<98xf32, #tpu.memory_space<smem>>
    %292 = vector.broadcast %291 : f32 to vector<8x256xf32>
    %293 = arith.mulf %292, %278 : vector<8x256xf32>
    %294 = arith.addf %264, %293 : vector<8x256xf32>
    %c81 = arith.constant 81 : index
    %295 = memref.load %arg3[%c81] : memref<98xf32, #tpu.memory_space<smem>>
    %296 = vector.broadcast %295 : f32 to vector<8x256xf32>
    %297 = arith.mulf %296, %278 : vector<8x256xf32>
    %298 = arith.addf %268, %297 : vector<8x256xf32>
    %c82 = arith.constant 82 : index
    %299 = memref.load %arg3[%c82] : memref<98xf32, #tpu.memory_space<smem>>
    %300 = vector.broadcast %299 : f32 to vector<8x256xf32>
    %301 = arith.mulf %300, %278 : vector<8x256xf32>
    %302 = arith.addf %272, %301 : vector<8x256xf32>
    %c83 = arith.constant 83 : index
    %303 = memref.load %arg3[%c83] : memref<98xf32, #tpu.memory_space<smem>>
    %304 = vector.broadcast %303 : f32 to vector<8x256xf32>
    %305 = arith.mulf %304, %278 : vector<8x256xf32>
    %306 = arith.addf %276, %305 : vector<8x256xf32>
    %c5_21 = arith.constant 5 : index
    %c0_22 = arith.constant 0 : index
    %c0_23 = arith.constant 0 : index
    %307 = vector.load %arg5[%c5_21, %c0_22, %c0_23] : memref<7x8x256xf32, #tpu.memory_space<vmem>>, vector<1x8x256xf32>
    %308 = vector.shape_cast %307 : vector<1x8x256xf32> to vector<8x256xf32>
    %c224_i32 = arith.constant 224 : i32
    %309 = tpu.dynamic_rotate %8 by %c224_i32 dim 1 : vector<8x256xf32>, i32 -> vector<8x256xf32>
    %310 = arith.mulf %309, %308 : vector<8x256xf32>
    %c35 = arith.constant 35 : index
    %311 = memref.load %arg3[%c35] : memref<98xf32, #tpu.memory_space<smem>>
    %312 = vector.broadcast %311 : f32 to vector<8x256xf32>
    %313 = arith.mulf %312, %310 : vector<8x256xf32>
    %314 = arith.addf %282, %313 : vector<8x256xf32>
    %c36 = arith.constant 36 : index
    %315 = memref.load %arg3[%c36] : memref<98xf32, #tpu.memory_space<smem>>
    %316 = vector.broadcast %315 : f32 to vector<8x256xf32>
    %317 = arith.mulf %316, %310 : vector<8x256xf32>
    %318 = arith.addf %286, %317 : vector<8x256xf32>
    %c37 = arith.constant 37 : index
    %319 = memref.load %arg3[%c37] : memref<98xf32, #tpu.memory_space<smem>>
    %320 = vector.broadcast %319 : f32 to vector<8x256xf32>
    %321 = arith.mulf %320, %310 : vector<8x256xf32>
    %322 = arith.addf %290, %321 : vector<8x256xf32>
    %c38 = arith.constant 38 : index
    %323 = memref.load %arg3[%c38] : memref<98xf32, #tpu.memory_space<smem>>
    %324 = vector.broadcast %323 : f32 to vector<8x256xf32>
    %325 = arith.mulf %324, %310 : vector<8x256xf32>
    %326 = arith.addf %294, %325 : vector<8x256xf32>
    %c39 = arith.constant 39 : index
    %327 = memref.load %arg3[%c39] : memref<98xf32, #tpu.memory_space<smem>>
    %328 = vector.broadcast %327 : f32 to vector<8x256xf32>
    %329 = arith.mulf %328, %310 : vector<8x256xf32>
    %330 = arith.addf %298, %329 : vector<8x256xf32>
    %c40 = arith.constant 40 : index
    %331 = memref.load %arg3[%c40] : memref<98xf32, #tpu.memory_space<smem>>
    %332 = vector.broadcast %331 : f32 to vector<8x256xf32>
    %333 = arith.mulf %332, %310 : vector<8x256xf32>
    %334 = arith.addf %302, %333 : vector<8x256xf32>
    %c41 = arith.constant 41 : index
    %335 = memref.load %arg3[%c41] : memref<98xf32, #tpu.memory_space<smem>>
    %336 = vector.broadcast %335 : f32 to vector<8x256xf32>
    %337 = arith.mulf %336, %310 : vector<8x256xf32>
    %338 = arith.addf %306, %337 : vector<8x256xf32>
    %c224_i32_24 = arith.constant 224 : i32
    %339 = tpu.dynamic_rotate %9 by %c224_i32_24 dim 1 : vector<8x256xf32>, i32 -> vector<8x256xf32>
    %340 = arith.mulf %339, %308 : vector<8x256xf32>
    %c84 = arith.constant 84 : index
    %341 = memref.load %arg3[%c84] : memref<98xf32, #tpu.memory_space<smem>>
    %342 = vector.broadcast %341 : f32 to vector<8x256xf32>
    %343 = arith.mulf %342, %340 : vector<8x256xf32>
    %344 = arith.addf %314, %343 : vector<8x256xf32>
    %c85 = arith.constant 85 : index
    %345 = memref.load %arg3[%c85] : memref<98xf32, #tpu.memory_space<smem>>
    %346 = vector.broadcast %345 : f32 to vector<8x256xf32>
    %347 = arith.mulf %346, %340 : vector<8x256xf32>
    %348 = arith.addf %318, %347 : vector<8x256xf32>
    %c86 = arith.constant 86 : index
    %349 = memref.load %arg3[%c86] : memref<98xf32, #tpu.memory_space<smem>>
    %350 = vector.broadcast %349 : f32 to vector<8x256xf32>
    %351 = arith.mulf %350, %340 : vector<8x256xf32>
    %352 = arith.addf %322, %351 : vector<8x256xf32>
    %c87 = arith.constant 87 : index
    %353 = memref.load %arg3[%c87] : memref<98xf32, #tpu.memory_space<smem>>
    %354 = vector.broadcast %353 : f32 to vector<8x256xf32>
    %355 = arith.mulf %354, %340 : vector<8x256xf32>
    %356 = arith.addf %326, %355 : vector<8x256xf32>
    %c88 = arith.constant 88 : index
    %357 = memref.load %arg3[%c88] : memref<98xf32, #tpu.memory_space<smem>>
    %358 = vector.broadcast %357 : f32 to vector<8x256xf32>
    %359 = arith.mulf %358, %340 : vector<8x256xf32>
    %360 = arith.addf %330, %359 : vector<8x256xf32>
    %c89 = arith.constant 89 : index
    %361 = memref.load %arg3[%c89] : memref<98xf32, #tpu.memory_space<smem>>
    %362 = vector.broadcast %361 : f32 to vector<8x256xf32>
    %363 = arith.mulf %362, %340 : vector<8x256xf32>
    %364 = arith.addf %334, %363 : vector<8x256xf32>
    %c90 = arith.constant 90 : index
    %365 = memref.load %arg3[%c90] : memref<98xf32, #tpu.memory_space<smem>>
    %366 = vector.broadcast %365 : f32 to vector<8x256xf32>
    %367 = arith.mulf %366, %340 : vector<8x256xf32>
    %368 = arith.addf %338, %367 : vector<8x256xf32>
    %c6_25 = arith.constant 6 : index
    %c0_26 = arith.constant 0 : index
    %c0_27 = arith.constant 0 : index
    %369 = vector.load %arg5[%c6_25, %c0_26, %c0_27] : memref<7x8x256xf32, #tpu.memory_space<vmem>>, vector<1x8x256xf32>
    %370 = vector.shape_cast %369 : vector<1x8x256xf32> to vector<8x256xf32>
    %c208_i32 = arith.constant 208 : i32
    %371 = tpu.dynamic_rotate %8 by %c208_i32 dim 1 : vector<8x256xf32>, i32 -> vector<8x256xf32>
    %372 = arith.mulf %371, %370 : vector<8x256xf32>
    %c42 = arith.constant 42 : index
    %373 = memref.load %arg3[%c42] : memref<98xf32, #tpu.memory_space<smem>>
    %374 = vector.broadcast %373 : f32 to vector<8x256xf32>
    %375 = arith.mulf %374, %372 : vector<8x256xf32>
    %376 = arith.addf %344, %375 : vector<8x256xf32>
    %c43 = arith.constant 43 : index
    %377 = memref.load %arg3[%c43] : memref<98xf32, #tpu.memory_space<smem>>
    %378 = vector.broadcast %377 : f32 to vector<8x256xf32>
    %379 = arith.mulf %378, %372 : vector<8x256xf32>
    %380 = arith.addf %348, %379 : vector<8x256xf32>
    %c44 = arith.constant 44 : index
    %381 = memref.load %arg3[%c44] : memref<98xf32, #tpu.memory_space<smem>>
    %382 = vector.broadcast %381 : f32 to vector<8x256xf32>
    %383 = arith.mulf %382, %372 : vector<8x256xf32>
    %384 = arith.addf %352, %383 : vector<8x256xf32>
    %c45 = arith.constant 45 : index
    %385 = memref.load %arg3[%c45] : memref<98xf32, #tpu.memory_space<smem>>
    %386 = vector.broadcast %385 : f32 to vector<8x256xf32>
    %387 = arith.mulf %386, %372 : vector<8x256xf32>
    %388 = arith.addf %356, %387 : vector<8x256xf32>
    %c46 = arith.constant 46 : index
    %389 = memref.load %arg3[%c46] : memref<98xf32, #tpu.memory_space<smem>>
    %390 = vector.broadcast %389 : f32 to vector<8x256xf32>
    %391 = arith.mulf %390, %372 : vector<8x256xf32>
    %392 = arith.addf %360, %391 : vector<8x256xf32>
    %c47 = arith.constant 47 : index
    %393 = memref.load %arg3[%c47] : memref<98xf32, #tpu.memory_space<smem>>
    %394 = vector.broadcast %393 : f32 to vector<8x256xf32>
    %395 = arith.mulf %394, %372 : vector<8x256xf32>
    %396 = arith.addf %364, %395 : vector<8x256xf32>
    %c48 = arith.constant 48 : index
    %397 = memref.load %arg3[%c48] : memref<98xf32, #tpu.memory_space<smem>>
    %398 = vector.broadcast %397 : f32 to vector<8x256xf32>
    %399 = arith.mulf %398, %372 : vector<8x256xf32>
    %400 = arith.addf %368, %399 : vector<8x256xf32>
    %c208_i32_28 = arith.constant 208 : i32
    %401 = tpu.dynamic_rotate %9 by %c208_i32_28 dim 1 : vector<8x256xf32>, i32 -> vector<8x256xf32>
    %402 = arith.mulf %401, %370 : vector<8x256xf32>
    %c91 = arith.constant 91 : index
    %403 = memref.load %arg3[%c91] : memref<98xf32, #tpu.memory_space<smem>>
    %404 = vector.broadcast %403 : f32 to vector<8x256xf32>
    %405 = arith.mulf %404, %402 : vector<8x256xf32>
    %406 = arith.addf %376, %405 : vector<8x256xf32>
    %c92 = arith.constant 92 : index
    %407 = memref.load %arg3[%c92] : memref<98xf32, #tpu.memory_space<smem>>
    %408 = vector.broadcast %407 : f32 to vector<8x256xf32>
    %409 = arith.mulf %408, %402 : vector<8x256xf32>
    %410 = arith.addf %380, %409 : vector<8x256xf32>
    %c93 = arith.constant 93 : index
    %411 = memref.load %arg3[%c93] : memref<98xf32, #tpu.memory_space<smem>>
    %412 = vector.broadcast %411 : f32 to vector<8x256xf32>
    %413 = arith.mulf %412, %402 : vector<8x256xf32>
    %414 = arith.addf %384, %413 : vector<8x256xf32>
    %c94 = arith.constant 94 : index
    %415 = memref.load %arg3[%c94] : memref<98xf32, #tpu.memory_space<smem>>
    %416 = vector.broadcast %415 : f32 to vector<8x256xf32>
    %417 = arith.mulf %416, %402 : vector<8x256xf32>
    %418 = arith.addf %388, %417 : vector<8x256xf32>
    %c95 = arith.constant 95 : index
    %419 = memref.load %arg3[%c95] : memref<98xf32, #tpu.memory_space<smem>>
    %420 = vector.broadcast %419 : f32 to vector<8x256xf32>
    %421 = arith.mulf %420, %402 : vector<8x256xf32>
    %422 = arith.addf %392, %421 : vector<8x256xf32>
    %c96 = arith.constant 96 : index
    %423 = memref.load %arg3[%c96] : memref<98xf32, #tpu.memory_space<smem>>
    %424 = vector.broadcast %423 : f32 to vector<8x256xf32>
    %425 = arith.mulf %424, %402 : vector<8x256xf32>
    %426 = arith.addf %396, %425 : vector<8x256xf32>
    %c97 = arith.constant 97 : index
    %427 = memref.load %arg3[%c97] : memref<98xf32, #tpu.memory_space<smem>>
    %428 = vector.broadcast %427 : f32 to vector<8x256xf32>
    %429 = arith.mulf %428, %402 : vector<8x256xf32>
    %430 = arith.addf %400, %429 : vector<8x256xf32>
    %c3_i32 = arith.constant 3 : i32
    %431 = tpu.dynamic_rotate %406 by %c3_i32 dim 1 : vector<8x256xf32>, i32 -> vector<8x256xf32>
    %c0_29 = arith.constant 0 : index
    %c0_30 = arith.constant 0 : index
    %c0_31 = arith.constant 0 : index
    %432 = vector.load %arg6[%c0_29, %c0_30, %c0_31] : memref<7x8x256xf32, #tpu.memory_space<vmem>>, vector<1x8x256xf32>
    %433 = vector.shape_cast %432 : vector<1x8x256xf32> to vector<8x256xf32>
    %434 = arith.mulf %431, %433 : vector<8x256xf32>
    %c2_i32 = arith.constant 2 : i32
    %435 = tpu.dynamic_rotate %410 by %c2_i32 dim 1 : vector<8x256xf32>, i32 -> vector<8x256xf32>
    %c1_32 = arith.constant 1 : index
    %c0_33 = arith.constant 0 : index
    %c0_34 = arith.constant 0 : index
    %436 = vector.load %arg6[%c1_32, %c0_33, %c0_34] : memref<7x8x256xf32, #tpu.memory_space<vmem>>, vector<1x8x256xf32>
    %437 = vector.shape_cast %436 : vector<1x8x256xf32> to vector<8x256xf32>
    %438 = arith.mulf %435, %437 : vector<8x256xf32>
    %439 = arith.addf %434, %438 : vector<8x256xf32>
    %c1_i32 = arith.constant 1 : i32
    %440 = tpu.dynamic_rotate %414 by %c1_i32 dim 1 : vector<8x256xf32>, i32 -> vector<8x256xf32>
    %c2_35 = arith.constant 2 : index
    %c0_36 = arith.constant 0 : index
    %c0_37 = arith.constant 0 : index
    %441 = vector.load %arg6[%c2_35, %c0_36, %c0_37] : memref<7x8x256xf32, #tpu.memory_space<vmem>>, vector<1x8x256xf32>
    %442 = vector.shape_cast %441 : vector<1x8x256xf32> to vector<8x256xf32>
    %443 = arith.mulf %440, %442 : vector<8x256xf32>
    %444 = arith.addf %439, %443 : vector<8x256xf32>
    %445 = arith.addf %444, %418 : vector<8x256xf32>
    %c255_i32 = arith.constant 255 : i32
    %446 = tpu.dynamic_rotate %422 by %c255_i32 dim 1 : vector<8x256xf32>, i32 -> vector<8x256xf32>
    %c4_38 = arith.constant 4 : index
    %c0_39 = arith.constant 0 : index
    %c0_40 = arith.constant 0 : index
    %447 = vector.load %arg6[%c4_38, %c0_39, %c0_40] : memref<7x8x256xf32, #tpu.memory_space<vmem>>, vector<1x8x256xf32>
    %448 = vector.shape_cast %447 : vector<1x8x256xf32> to vector<8x256xf32>
    %449 = arith.mulf %446, %448 : vector<8x256xf32>
    %450 = arith.addf %445, %449 : vector<8x256xf32>
    %c254_i32 = arith.constant 254 : i32
    %451 = tpu.dynamic_rotate %426 by %c254_i32 dim 1 : vector<8x256xf32>, i32 -> vector<8x256xf32>
    %c5_41 = arith.constant 5 : index
    %c0_42 = arith.constant 0 : index
    %c0_43 = arith.constant 0 : index
    %452 = vector.load %arg6[%c5_41, %c0_42, %c0_43] : memref<7x8x256xf32, #tpu.memory_space<vmem>>, vector<1x8x256xf32>
    %453 = vector.shape_cast %452 : vector<1x8x256xf32> to vector<8x256xf32>
    %454 = arith.mulf %451, %453 : vector<8x256xf32>
    %455 = arith.addf %450, %454 : vector<8x256xf32>
    %c253_i32 = arith.constant 253 : i32
    %456 = tpu.dynamic_rotate %430 by %c253_i32 dim 1 : vector<8x256xf32>, i32 -> vector<8x256xf32>
    %c6_44 = arith.constant 6 : index
    %c0_45 = arith.constant 0 : index
    %c0_46 = arith.constant 0 : index
    %457 = vector.load %arg6[%c6_44, %c0_45, %c0_46] : memref<7x8x256xf32, #tpu.memory_space<vmem>>, vector<1x8x256xf32>
    %458 = vector.shape_cast %457 : vector<1x8x256xf32> to vector<8x256xf32>
    %459 = arith.mulf %456, %458 : vector<8x256xf32>
    %460 = arith.addf %455, %459 : vector<8x256xf32>
    %c0_47 = arith.constant 0 : index
    %461 = memref.load %arg4[%c0_47] : memref<1xf32, #tpu.memory_space<smem>>
    %462 = vector.broadcast %461 : f32 to vector<8x256xf32>
    %463 = arith.addf %460, %462 : vector<8x256xf32>
    %cst = arith.constant 0.000000e+00 : f32
    %464 = vector.broadcast %cst : f32 to vector<8x256xf32>
    %465 = arith.subf %464, %463 : vector<8x256xf32>
    %466 = math.exp %465 : vector<8x256xf32>
    %cst_48 = arith.constant 1.000000e+00 : f32
    %467 = vector.broadcast %cst_48 : f32 to vector<8x256xf32>
    %468 = arith.addf %467, %466 : vector<8x256xf32>
    %469 = tpu.reciprocal %468 : vector<8x256xf32> -> vector<8x256xf32>
    %c0_49 = arith.constant 0 : index
    %c0_50 = arith.constant 0 : index
    %470 = vector.load %arg7[%c0_49, %c0_50] : memref<8x256xf32, #tpu.memory_space<vmem>>, vector<8x256xf32>
    tpu.vector_store %arg7[%c0_49, %c0_50], %469 {strides = array<i32>} : memref<8x256xf32, #tpu.memory_space<vmem>>, vector<8x256xf32>,
    return
  }
  func.func @transform_0(%arg0: i32, %arg1: i32) -> (i32, i32) {
    %c0_i32 = arith.constant 0 : i32
    return %arg0, %arg1 : i32, i32
  }
  func.func @transform_1(%arg0: i32, %arg1: i32) -> i32 {
    %c0_i32 = arith.constant 0 : i32
    %c0_i32_0 = arith.constant 0 : i32
    return %c0_i32 : i32
  }
  func.func @transform_2(%arg0: i32, %arg1: i32) -> i32 {
    %c0_i32 = arith.constant 0 : i32
    %c0_i32_0 = arith.constant 0 : i32
    return %c0_i32 : i32
  }
  func.func @transform_3(%arg0: i32, %arg1: i32) -> (i32, i32, i32) {
    %c0_i32 = arith.constant 0 : i32
    %c0_i32_0 = arith.constant 0 : i32
    %c0_i32_1 = arith.constant 0 : i32
    %c0_i32_2 = arith.constant 0 : i32
    return %c0_i32, %c0_i32_0, %c0_i32_1 : i32, i32, i32
  }
  func.func @transform_4(%arg0: i32, %arg1: i32) -> (i32, i32, i32) {
    %c0_i32 = arith.constant 0 : i32
    %c0_i32_0 = arith.constant 0 : i32
    %c0_i32_1 = arith.constant 0 : i32
    %c0_i32_2 = arith.constant 0 : i32
    return %c0_i32, %c0_i32_0, %c0_i32_1 : i32, i32, i32
  }
  func.func @transform_5(%arg0: i32, %arg1: i32) -> (i32, i32) {
    %c0_i32 = arith.constant 0 : i32
    %c0_i32_0 = arith.constant 0 : i32
    return %arg0, %c0_i32 : i32, i32
  }
}

</mosaic_0001>

<llo_original>
// kernel: tpu_custom_call.1
$region0: #{tpu_custom_call.1}
  #allocation0 [shape = 'u32[]', space=smem, size = 0x4, offset = 0x4, fixed_abs, tag = 'smem constant byte address 0x4 - core index']
  #allocation1 [shape = 'u32[144,128]{1,0:T(1,128)}', space=vmem, size = 0x12000, scoped, tag = 'internal scratch']
  #allocation2 [shape = 'f32[1]{0:T(128)S(6)}', space=smem, size = 0x200, scoped, tag = 'scoped memory for tpu_custom_call.1']
  %s0 = inlined_call_operand.hbm [shape: f32[8,1024], index: 0, kind: input, shape index: {}]
  %s1 = inlined_call_operand.vmem [shape: f32[98], index: 1, kind: input, shape index: {}]
  %s2 = inlined_call_operand.<no memory space> [shape: f32[1], index: 2, kind: input, shape index: {}]
  %s3 = inlined_call_operand.hbm [shape: f32[7,8,256], index: 3, kind: input, shape index: {}]
  %s4 = inlined_call_operand.hbm [shape: f32[7,8,256], index: 4, kind: input, shape index: {}]
  %s5 = inlined_call_operand.hbm [shape: f32[8,256], index: 5, kind: output, shape index: {}]
  %s6 = sld [smem:[#allocation0]]
  $region46: #{tpu_custom_call.1} parent=0
    _
  %s8 = ssub.s32 1, %s6
  %s9 = scalar_select 0, %s8, %s6
  %10 = sst [smem:[#allocation2]] %s2
  $region1: #{tpu_custom_call.1} parent=0
    #allocation3 [shape = 'u8[32768]{0}', space=vmem, size = 0x8000, scoped, tag = 'input window, operand 0, single buffered']
    #allocation4 [shape = 's32[1]{0}', space=sflag, size = 0x4, scoped, tag = 'scoped memory for tpu_custom_call.1']
    #allocation5 [shape = 's32[1]{0}', space=sflag, size = 0x4, scoped, tag = 'scoped memory for tpu_custom_call.1']
    #allocation6 [shape = 's32[1]{0}', space=sflag, size = 0x4, scoped, tag = 'scoped memory for tpu_custom_call.1']
    #allocation7 [shape = 'u8[512]{0}', space=smem, size = 0x200, scoped, tag = 'input window, operand 1, single buffered']
    #allocation8 [shape = 'u8[57344]{0}', space=vmem, size = 0xe000, scoped, tag = 'input window, operand 3, single buffered']
    #allocation9 [shape = 's32[1]{0}', space=sflag, size = 0x4, scoped, tag = 'scoped memory for tpu_custom_call.1']
    #allocation10 [shape = 'u8[57344]{0}', space=vmem, size = 0xe000, scoped, tag = 'input window, operand 4, single buffered']
    #allocation11 [shape = 'u8[8192]{0}', space=vmem, size = 0x2000, scoped, tag = 'output window, operand 0, single buffered']
    %11 = vsyncpa [#allocation4], 0
    %12 = vsyncpa [#allocation6], 0
    %13 = vsyncpa [#allocation9], 0
    %14 = vsyncpa [#allocation5], 0
    // Predicated region
    $region2: #{tpu_custom_call.1} parent=1 // pred_check
      _
    $region3: #{tpu_custom_call.1} parent=1 // pred_check_branch
      %16 = sbr.rel (0) target = $region5
    $region4: #{tpu_custom_call.1} parent=1 // pred_region
      %s18 = ssub.s32 1024, 1024
      %19 = vsyncadd [#allocation4], %s18
      %s21 = sshll.u32 [#allocation3], 4
      %s22 = int_to_ptr.vmem [resolvable:$true] %s21
      %24 = dma.hbm_to_vmem [thread:$0]  %s0, 1024, %s22, [#allocation4]
    $region5: #{tpu_custom_call.1} parent=1 // pred_fallthru
      _
    // Predicated region
    $region6: #{tpu_custom_call.1} parent=1 // pred_check
      _
    $region7: #{tpu_custom_call.1} parent=1 // pred_check_branch
      %26 = sbr.rel (0) target = $region9
    $region8: #{tpu_custom_call.1} parent=1 // pred_region
      %s28 = ssub.s32 16, 16
      %29 = vsyncadd [#allocation6], %s28
      %s31 = sshll.u32 %s1, 4
      %s32 = int_to_ptr.vmem [resolvable:$true] %s31
      %34 = dma.vmem_to_smem %s32, 16, [#allocation7], [#allocation6]
    $region9: #{tpu_custom_call.1} parent=1 // pred_fallthru
      _
    // Predicated region
    $region10: #{tpu_custom_call.1} parent=1 // pred_check
      _
    $region11: #{tpu_custom_call.1} parent=1 // pred_check_branch
      %36 = sbr.rel (0) target = $region13
    $region12: #{tpu_custom_call.1} parent=1 // pred_region
      _
    $region13: #{tpu_custom_call.1} parent=1 // pred_fallthru
      _
    // Predicated region
    $region14: #{tpu_custom_call.1} parent=1 // pred_check
      _
    $region15: #{tpu_custom_call.1} parent=1 // pred_check_branch
      %38 = sbr.rel (0) target = $region17
    $region16: #{tpu_custom_call.1} parent=1 // pred_region
      %s40 = ssub.s32 1792, 1792
      %41 = vsyncadd [#allocation9], %s40
      %s42 = sshll.u32 [#allocation8], 4
      %s43 = int_to_ptr.vmem [resolvable:$true] %s42
      %48 = dma.hbm_to_vmem [thread:$0]  %s3, 1792, %s43, [#allocation9], 256, 256, 16
    $region17: #{tpu_custom_call.1} parent=1 // pred_fallthru
      _
    // Predicated region
    $region18: #{tpu_custom_call.1} parent=1 // pred_check
      _
    $region19: #{tpu_custom_call.1} parent=1 // pred_check_branch
      %50 = sbr.rel (0) target = $region21
    $region20: #{tpu_custom_call.1} parent=1 // pred_region
      %s52 = ssub.s32 1792, 1792
      %53 = vsyncadd [#allocation9], %s52
      %s54 = sshll.u32 [#allocation10], 4
      %s55 = int_to_ptr.vmem [resolvable:$true] %s54
      %60 = dma.hbm_to_vmem [thread:$0]  %s4, 1792, %s55, [#allocation9], 256, 256, 16
    $region21: #{tpu_custom_call.1} parent=1 // pred_fallthru
      _
    // Predicated region
    $region22: #{tpu_custom_call.1} parent=1 // pred_check
      _
    $region23: #{tpu_custom_call.1} parent=1 // pred_check_branch
      %62 = sbr.rel (0) target = $region25
    $region24: #{tpu_custom_call.1} parent=1 // pred_region
      %63 = dma.done [#allocation4], 1024
    $region25: #{tpu_custom_call.1} parent=1 // pred_fallthru
      _
    // Predicated region
    $region26: #{tpu_custom_call.1} parent=1 // pred_check
      _
    $region27: #{tpu_custom_call.1} parent=1 // pred_check_branch
      %65 = sbr.rel (0) target = $region29
    $region28: #{tpu_custom_call.1} parent=1 // pred_region
      %66 = dma.done [#allocation6], 16
    $region29: #{tpu_custom_call.1} parent=1 // pred_fallthru
      _
    // Predicated region
    $region30: #{tpu_custom_call.1} parent=1 // pred_check
      _
    $region31: #{tpu_custom_call.1} parent=1 // pred_check_branch
      %68 = sbr.rel (0) target = $region33
    $region32: #{tpu_custom_call.1} parent=1 // pred_region
      %69 = dma.done [#allocation9], 1792
    $region33: #{tpu_custom_call.1} parent=1 // pred_fallthru
      _
    // Predicated region
    $region34: #{tpu_custom_call.1} parent=1 // pred_check
      _
    $region35: #{tpu_custom_call.1} parent=1 // pred_check_branch
      %71 = sbr.rel (0) target = $region37
    $region36: #{tpu_custom_call.1} parent=1 // pred_region
      %72 = dma.done [#allocation9], 1792
    $region37: #{tpu_custom_call.1} parent=1 // pred_fallthru
      _
    %73 = sfence
    %v74 = vld [vmem:[#allocation3] sm:$0xff]
    %v75 = vld [vmem:[#allocation3 + $0x8] sm:$0xff]
    %v76 = vld [vmem:[#allocation3 + $0x10] sm:$0xff]
    %v77 = vld [vmem:[#allocation3 + $0x18] sm:$0xff]
    %v78 = vadd.f32 %v74, %v76
    %v79 = vadd.f32 %v75, %v77
    %v80 = vmax.f32 %v74, %v76
    %v81 = vmax.f32 %v75, %v77
    %v82 = vld [vmem:[#allocation3 + $0x20] sm:$0xff]
    %v83 = vld [vmem:[#allocation3 + $0x28] sm:$0xff]
    %v84 = vadd.f32 %v78, %v82
    %v85 = vadd.f32 %v79, %v83
    %v86 = vmax.f32 %v80, %v82
    %v87 = vmax.f32 %v81, %v83
    %v88 = vld [vmem:[#allocation3 + $0x30] sm:$0xff]
    %v89 = vld [vmem:[#allocation3 + $0x38] sm:$0xff]
    %v90 = vadd.f32 %v84, %v88
    %v91 = vadd.f32 %v85, %v89
    %v92 = vmax.f32 %v86, %v88
    %v93 = vmax.f32 %v87, %v89
    %v94 = vld [vmem:[#allocation8] sm:$0xff]
    %v95 = vld [vmem:[#allocation8 + $0x8] sm:$0xff]
    %96 = vrot.lane.b32.xlu0 %v90, 48
    %v97 = vpop.permute.xlu0 %96
    %98 = vrot.lane.b32.xlu0 %v91, 48
    %v99 = vpop.permute.xlu0 %98
    %v100 = vlaneseq
    %v101 = vand.u32 %v100, 127
    %vm102 = vcmp.lt.s32.totalorder %v101, 48
    %v103 = vsel %vm102, %v97, %v99
    %v104 = vsel %vm102, %v99, %v97
    %v105 = vmul.f32 %v104, %v94
    %v106 = vmul.f32 %v103, %v95
    %s107 = sld [smem:[#allocation7]]
    %v108 = vstv %s107
    %v109 = vmul.f32 %v108, %v105
    %v110 = vmul.f32 %v108, %v106
    %s111 = sld [smem:[#allocation7 + $0x1]]
    %v112 = vstv %s111
    %v113 = vmul.f32 %v112, %v105
    %v114 = vmul.f32 %v112, %v106
    %s115 = sld [smem:[#allocation7 + $0x2]]
    %v116 = vstv %s115
    %v117 = vmul.f32 %v116, %v105
    %v118 = vmul.f32 %v116, %v106
    %s119 = sld [smem:[#allocation7 + $0x3]]
    %v120 = vstv %s119
    %v121 = vmul.f32 %v120, %v105
    %v122 = vmul.f32 %v120, %v106
    %s123 = sld [smem:[#allocation7 + $0x4]]
    %v124 = vstv %s123
    %v125 = vmul.f32 %v124, %v105
    %v126 = vmul.f32 %v124, %v106
    %s127 = sld [smem:[#allocation7 + $0x5]]
    %v128 = vstv %s127
    %v129 = vmul.f32 %v128, %v105
    %v130 = vmul.f32 %v128, %v106
    %s131 = sld [smem:[#allocation7 + $0x6]]
    %v132 = vstv %s131
    %v133 = vmul.f32 %v132, %v105
    %v134 = vmul.f32 %v132, %v106
    %135 = vrot.lane.b32.xlu0 %v92, 48
    %v136 = vpop.permute.xlu0 %135
    %137 = vrot.lane.b32.xlu0 %v93, 48
    %v138 = vpop.permute.xlu0 %137
    %v139 = vsel %vm102, %v136, %v138
    %v140 = vsel %vm102, %v138, %v136
    %v141 = vmul.f32 %v140, %v94
    %v142 = vmul.f32 %v139, %v95
    %s143 = sld [smem:[#allocation7 + $0x31]]
    %v144 = vstv %s143
    %v145 = vmul.f32 %v144, %v141
    %v146 = vmul.f32 %v144, %v142
    %v147 = vadd.f32 %v109, %v145
    %v148 = vadd.f32 %v110, %v146
    %s149 = sld [smem:[#allocation7 + $0x32]]
    %v150 = vstv %s149
    %v151 = vmul.f32 %v150, %v141
    %v152 = vmul.f32 %v150, %v142
    %v153 = vadd.f32 %v113, %v151
    %v154 = vadd.f32 %v114, %v152
    %s155 = sld [smem:[#allocation7 + $0x33]]
    %v156 = vstv %s155
    %v157 = vmul.f32 %v156, %v141
    %v158 = vmul.f32 %v156, %v142
    %v159 = vadd.f32 %v117, %v157
    %v160 = vadd.f32 %v118, %v158
    %s161 = sld [smem:[#allocation7 + $0x34]]
    %v162 = vstv %s161
    %v163 = vmul.f32 %v162, %v141
    %v164 = vmul.f32 %v162, %v142
    %v165 = vadd.f32 %v121, %v163
    %v166 = vadd.f32 %v122, %v164
    %s167 = sld [smem:[#allocation7 + $0x35]]
    %v168 = vstv %s167
    %v169 = vmul.f32 %v168, %v141
    %v170 = vmul.f32 %v168, %v142
    %v171 = vadd.f32 %v125, %v169
    %v172 = vadd.f32 %v126, %v170
    %s173 = sld [smem:[#allocation7 + $0x36]]
    %v174 = vstv %s173
    %v175 = vmul.f32 %v174, %v141
    %v176 = vmul.f32 %v174, %v142
    %v177 = vadd.f32 %v129, %v175
    %v178 = vadd.f32 %v130, %v176
    %s179 = sld [smem:[#allocation7 + $0x37]]
    %v180 = vstv %s179
    %v181 = vmul.f32 %v180, %v141
    %v182 = vmul.f32 %v180, %v142
    %v183 = vadd.f32 %v133, %v181
    %v184 = vadd.f32 %v134, %v182
    %s185 = scalar_lea.vmem [#allocation8], 16
    %v186 = vld [vmem:[%s185] sm:$0xff]
    %v187 = vld [vmem:[%s185 + $0x8] sm:$0xff]
    %188 = vrot.lane.b32.xlu0 %v90, 32
    %v189 = vpop.permute.xlu0 %188
    %190 = vrot.lane.b32.xlu0 %v91, 32
    %v191 = vpop.permute.xlu0 %190
    %vm192 = vcmp.lt.s32.totalorder %v101, 32
    %v193 = vsel %vm192, %v189, %v191
    %v194 = vsel %vm192, %v191, %v189
    %v195 = vmul.f32 %v194, %v186
    %v196 = vmul.f32 %v193, %v187
    %s197 = sld [smem:[#allocation7 + $0x7]]
    %v198 = vstv %s197
    %v199 = vmul.f32 %v198, %v195
    %v200 = vmul.f32 %v198, %v196
    %v201 = vadd.f32 %v147, %v199
    %v202 = vadd.f32 %v148, %v200
    %s203 = sld [smem:[#allocation7 + $0x8]]
    %v204 = vstv %s203
    %v205 = vmul.f32 %v204, %v195
    %v206 = vmul.f32 %v204, %v196
    %v207 = vadd.f32 %v153, %v205
    %v208 = vadd.f32 %v154, %v206
    %s209 = sld [smem:[#allocation7 + $0x9]]
    %v210 = vstv %s209
    %v211 = vmul.f32 %v210, %v195
    %v212 = vmul.f32 %v210, %v196
    %v213 = vadd.f32 %v159, %v211
    %v214 = vadd.f32 %v160, %v212
    %s215 = sld [smem:[#allocation7 + $0xa]]
    %v216 = vstv %s215
    %v217 = vmul.f32 %v216, %v195
    %v218 = vmul.f32 %v216, %v196
    %v219 = vadd.f32 %v165, %v217
    %v220 = vadd.f32 %v166, %v218
    %s221 = sld [smem:[#allocation7 + $0xb]]
    %v222 = vstv %s221
    %v223 = vmul.f32 %v222, %v195
    %v224 = vmul.f32 %v222, %v196
    %v225 = vadd.f32 %v171, %v223
    %v226 = vadd.f32 %v172, %v224
    %s227 = sld [smem:[#allocation7 + $0xc]]
    %v228 = vstv %s227
    %v229 = vmul.f32 %v228, %v195
    %v230 = vmul.f32 %v228, %v196
    %v231 = vadd.f32 %v177, %v229
    %v232 = vadd.f32 %v178, %v230
    %s233 = sld [smem:[#allocation7 + $0xd]]
    %v234 = vstv %s233
    %v235 = vmul.f32 %v234, %v195
    %v236 = vmul.f32 %v234, %v196
    %v237 = vadd.f32 %v183, %v235
    %v238 = vadd.f32 %v184, %v236
    %239 = vrot.lane.b32.xlu0 %v92, 32
    %v240 = vpop.permute.xlu0 %239
    %241 = vrot.lane.b32.xlu0 %v93, 32
    %v242 = vpop.permute.xlu0 %241
    %v243 = vsel %vm192, %v240, %v242
    %v244 = vsel %vm192, %v242, %v240
    %v245 = vmul.f32 %v244, %v186
    %v246 = vmul.f32 %v243, %v187
    %s247 = sld [smem:[#allocation7 + $0x38]]
    %v248 = vstv %s247
    %v249 = vmul.f32 %v248, %v245
    %v250 = vmul.f32 %v248, %v246
    %v251 = vadd.f32 %v201, %v249
    %v252 = vadd.f32 %v202, %v250
    %s253 = sld [smem:[#allocation7 + $0x39]]
    %v254 = vstv %s253
    %v255 = vmul.f32 %v254, %v245
    %v256 = vmul.f32 %v254, %v246
    %v257 = vadd.f32 %v207, %v255
    %v258 = vadd.f32 %v208, %v256
    %s259 = sld [smem:[#allocation7 + $0x3a]]
    %v260 = vstv %s259
    %v261 = vmul.f32 %v260, %v245
    %v262 = vmul.f32 %v260, %v246
    %v263 = vadd.f32 %v213, %v261
    %v264 = vadd.f32 %v214, %v262
    %s265 = sld [smem:[#allocation7 + $0x3b]]
    %v266 = vstv %s265
    %v267 = vmul.f32 %v266, %v245
    %v268 = vmul.f32 %v266, %v246
    %v269 = vadd.f32 %v219, %v267
    %v270 = vadd.f32 %v220, %v268
    %s271 = sld [smem:[#allocation7 + $0x3c]]
    %v272 = vstv %s271
    %v273 = vmul.f32 %v272, %v245
    %v274 = vmul.f32 %v272, %v246
    %v275 = vadd.f32 %v225, %v273
    %v276 = vadd.f32 %v226, %v274
    %s277 = sld [smem:[#allocation7 + $0x3d]]
    %v278 = vstv %s277
    %v279 = vmul.f32 %v278, %v245
    %v280 = vmul.f32 %v278, %v246
    %v281 = vadd.f32 %v231, %v279
    %v282 = vadd.f32 %v232, %v280
    %s283 = sld [smem:[#allocation7 + $0x3e]]
    %v284 = vstv %s283
    %v285 = vmul.f32 %v284, %v245
    %v286 = vmul.f32 %v284, %v246
    %v287 = vadd.f32 %v237, %v285
    %v288 = vadd.f32 %v238, %v286
    %s289 = scalar_lea.vmem [#allocation8], 32
    %v290 = vld [vmem:[%s289] sm:$0xff]
    %v291 = vld [vmem:[%s289 + $0x8] sm:$0xff]
    %292 = vrot.lane.b32.xlu0 %v90, 16
    %v293 = vpop.permute.xlu0 %292
    %294 = vrot.lane.b32.xlu0 %v91, 16
    %v295 = vpop.permute.xlu0 %294
    %vm296 = vcmp.lt.s32.totalorder %v101, 16
    %v297 = vsel %vm296, %v293, %v295
    %v298 = vsel %vm296, %v295, %v293
    %v299 = vmul.f32 %v298, %v290
    %v300 = vmul.f32 %v297, %v291
    %s301 = sld [smem:[#allocation7 + $0xe]]
    %v302 = vstv %s301
    %v303 = vmul.f32 %v302, %v299
    %v304 = vmul.f32 %v302, %v300
    %v305 = vadd.f32 %v251, %v303
    %v306 = vadd.f32 %v252, %v304
    %s307 = sld [smem:[#allocation7 + $0xf]]
    %v308 = vstv %s307
    %v309 = vmul.f32 %v308, %v299
    %v310 = vmul.f32 %v308, %v300
    %v311 = vadd.f32 %v257, %v309
    %v312 = vadd.f32 %v258, %v310
    %s313 = sld [smem:[#allocation7 + $0x10]]
    %v314 = vstv %s313
    %v315 = vmul.f32 %v314, %v299
    %v316 = vmul.f32 %v314, %v300
    %v317 = vadd.f32 %v263, %v315
    %v318 = vadd.f32 %v264, %v316
    %s319 = sld [smem:[#allocation7 + $0x11]]
    %v320 = vstv %s319
    %v321 = vmul.f32 %v320, %v299
    %v322 = vmul.f32 %v320, %v300
    %v323 = vadd.f32 %v269, %v321
    %v324 = vadd.f32 %v270, %v322
    %s325 = sld [smem:[#allocation7 + $0x12]]
    %v326 = vstv %s325
    %v327 = vmul.f32 %v326, %v299
    %v328 = vmul.f32 %v326, %v300
    %v329 = vadd.f32 %v275, %v327
    %v330 = vadd.f32 %v276, %v328
    %s331 = sld [smem:[#allocation7 + $0x13]]
    %v332 = vstv %s331
    %v333 = vmul.f32 %v332, %v299
    %v334 = vmul.f32 %v332, %v300
    %v335 = vadd.f32 %v281, %v333
    %v336 = vadd.f32 %v282, %v334
    %s337 = sld [smem:[#allocation7 + $0x14]]
    %v338 = vstv %s337
    %v339 = vmul.f32 %v338, %v299
    %v340 = vmul.f32 %v338, %v300
    %v341 = vadd.f32 %v287, %v339
    %v342 = vadd.f32 %v288, %v340
    %343 = vrot.lane.b32.xlu0 %v92, 16
    %v344 = vpop.permute.xlu0 %343
    %345 = vrot.lane.b32.xlu0 %v93, 16
    %v346 = vpop.permute.xlu0 %345
    %v347 = vsel %vm296, %v344, %v346
    %v348 = vsel %vm296, %v346, %v344
    %v349 = vmul.f32 %v348, %v290
    %v350 = vmul.f32 %v347, %v291
    %s351 = sld [smem:[#allocation7 + $0x3f]]
    %v352 = vstv %s351
    %v353 = vmul.f32 %v352, %v349
    %v354 = vmul.f32 %v352, %v350
    %v355 = vadd.f32 %v305, %v353
    %v356 = vadd.f32 %v306, %v354
    %s357 = sld [smem:[#allocation7 + $0x40]]
    %v358 = vstv %s357
    %v359 = vmul.f32 %v358, %v349
    %v360 = vmul.f32 %v358, %v350
    %v361 = vadd.f32 %v311, %v359
    %v362 = vadd.f32 %v312, %v360
    %s363 = sld [smem:[#allocation7 + $0x41]]
    %v364 = vstv %s363
    %v365 = vmul.f32 %v364, %v349
    %v366 = vmul.f32 %v364, %v350
    %v367 = vadd.f32 %v317, %v365
    %v368 = vadd.f32 %v318, %v366
    %s369 = sld [smem:[#allocation7 + $0x42]]
    %v370 = vstv %s369
    %v371 = vmul.f32 %v370, %v349
    %v372 = vmul.f32 %v370, %v350
    %v373 = vadd.f32 %v323, %v371
    %v374 = vadd.f32 %v324, %v372
    %s375 = sld [smem:[#allocation7 + $0x43]]
    %v376 = vstv %s375
    %v377 = vmul.f32 %v376, %v349
    %v378 = vmul.f32 %v376, %v350
    %v379 = vadd.f32 %v329, %v377
    %v380 = vadd.f32 %v330, %v378
    %s381 = sld [smem:[#allocation7 + $0x44]]
    %v382 = vstv %s381
    %v383 = vmul.f32 %v382, %v349
    %v384 = vmul.f32 %v382, %v350
    %v385 = vadd.f32 %v335, %v383
    %v386 = vadd.f32 %v336, %v384
    %s387 = sld [smem:[#allocation7 + $0x45]]
    %v388 = vstv %s387
    %v389 = vmul.f32 %v388, %v349
    %v390 = vmul.f32 %v388, %v350
    %v391 = vadd.f32 %v341, %v389
    %v392 = vadd.f32 %v342, %v390
    %s393 = sld [smem:[#allocation7 + $0x15]]
    %v394 = vstv %s393
    %v395 = vmul.f32 %v394, %v90
    %v396 = vmul.f32 %v394, %v91
    %v397 = vadd.f32 %v355, %v395
    %v398 = vadd.f32 %v356, %v396
    %s399 = sld [smem:[#allocation7 + $0x16]]
    %v400 = vstv %s399
    %v401 = vmul.f32 %v400, %v90
    %v402 = vmul.f32 %v400, %v91
    %v403 = vadd.f32 %v361, %v401
    %v404 = vadd.f32 %v362, %v402
    %s405 = sld [smem:[#allocation7 + $0x17]]
    %v406 = vstv %s405
    %v407 = vmul.f32 %v406, %v90
    %v408 = vmul.f32 %v406, %v91
    %v409 = vadd.f32 %v367, %v407
    %v410 = vadd.f32 %v368, %v408
    %s411 = sld [smem:[#allocation7 + $0x18]]
    %v412 = vstv %s411
    %v413 = vmul.f32 %v412, %v90
    %v414 = vmul.f32 %v412, %v91
    %v415 = vadd.f32 %v373, %v413
    %v416 = vadd.f32 %v374, %v414
    %s417 = sld [smem:[#allocation7 + $0x19]]
    %v418 = vstv %s417
    %v419 = vmul.f32 %v418, %v90
    %v420 = vmul.f32 %v418, %v91
    %v421 = vadd.f32 %v379, %v419
    %v422 = vadd.f32 %v380, %v420
    %s423 = sld [smem:[#allocation7 + $0x1a]]
    %v424 = vstv %s423
    %v425 = vmul.f32 %v424, %v90
    %v426 = vmul.f32 %v424, %v91
    %v427 = vadd.f32 %v385, %v425
    %v428 = vadd.f32 %v386, %v426
    %s429 = sld [smem:[#allocation7 + $0x1b]]
    %v430 = vstv %s429
    %v431 = vmul.f32 %v430, %v90
    %v432 = vmul.f32 %v430, %v91
    %v433 = vadd.f32 %v391, %v431
    %v434 = vadd.f32 %v392, %v432
    %s435 = sld [smem:[#allocation7 + $0x46]]
    %v436 = vstv %s435
    %v437 = vmul.f32 %v436, %v92
    %v438 = vmul.f32 %v436, %v93
    %v439 = vadd.f32 %v397, %v437
    %v440 = vadd.f32 %v398, %v438
    %s441 = sld [smem:[#allocation7 + $0x47]]
    %v442 = vstv %s441
    %v443 = vmul.f32 %v442, %v92
    %v444 = vmul.f32 %v442, %v93
    %v445 = vadd.f32 %v403, %v443
    %v446 = vadd.f32 %v404, %v444
    %s447 = sld [smem:[#allocation7 + $0x48]]
    %v448 = vstv %s447
    %v449 = vmul.f32 %v448, %v92
    %v450 = vmul.f32 %v448, %v93
    %v451 = vadd.f32 %v409, %v449
    %v452 = vadd.f32 %v410, %v450
    %s453 = sld [smem:[#allocation7 + $0x49]]
    %v454 = vstv %s453
    %v455 = vmul.f32 %v454, %v92
    %v456 = vmul.f32 %v454, %v93
    %v457 = vadd.f32 %v415, %v455
    %v458 = vadd.f32 %v416, %v456
    %s459 = sld [smem:[#allocation7 + $0x4a]]
    %v460 = vstv %s459
    %v461 = vmul.f32 %v460, %v92
    %v462 = vmul.f32 %v460, %v93
    %v463 = vadd.f32 %v421, %v461
    %v464 = vadd.f32 %v422, %v462
    %s465 = sld [smem:[#allocation7 + $0x4b]]
    %v466 = vstv %s465
    %v467 = vmul.f32 %v466, %v92
    %v468 = vmul.f32 %v466, %v93
    %v469 = vadd.f32 %v427, %v467
    %v470 = vadd.f32 %v428, %v468
    %s471 = sld [smem:[#allocation7 + $0x4c]]
    %v472 = vstv %s471
    %v473 = vmul.f32 %v472, %v92
    %v474 = vmul.f32 %v472, %v93
    %v475 = vadd.f32 %v433, %v473
    %v476 = vadd.f32 %v434, %v474
    %s477 = scalar_lea.vmem [#allocation8], 64
    %v478 = vld [vmem:[%s477] sm:$0xff]
    %v479 = vld [vmem:[%s477 + $0x8] sm:$0xff]
    %480 = vrot.lane.b32.xlu0 %v90, 112
    %v481 = vpop.permute.xlu0 %480
    %482 = vrot.lane.b32.xlu0 %v91, 112
    %v483 = vpop.permute.xlu0 %482
    %vm484 = vcmp.lt.s32.totalorder %v101, 112
    %v485 = vsel %vm484, %v481, %v483
    %v486 = vsel %vm484, %v483, %v481
    %v487 = vmul.f32 %v485, %v478
    %v488 = vmul.f32 %v486, %v479
    %s489 = sld [smem:[#allocation7 + $0x1c]]
    %v490 = vstv %s489
    %v491 = vmul.f32 %v490, %v487
    %v492 = vmul.f32 %v490, %v488
    %v493 = vadd.f32 %v439, %v491
    %v494 = vadd.f32 %v440, %v492
    %s495 = sld [smem:[#allocation7 + $0x1d]]
    %v496 = vstv %s495
    %v497 = vmul.f32 %v496, %v487
    %v498 = vmul.f32 %v496, %v488
    %v499 = vadd.f32 %v445, %v497
    %v500 = vadd.f32 %v446, %v498
    %s501 = sld [smem:[#allocation7 + $0x1e]]
    %v502 = vstv %s501
    %v503 = vmul.f32 %v502, %v487
    %v504 = vmul.f32 %v502, %v488
    %v505 = vadd.f32 %v451, %v503
    %v506 = vadd.f32 %v452, %v504
    %s507 = sld [smem:[#allocation7 + $0x1f]]
    %v508 = vstv %s507
    %v509 = vmul.f32 %v508, %v487
    %v510 = vmul.f32 %v508, %v488
    %v511 = vadd.f32 %v457, %v509
    %v512 = vadd.f32 %v458, %v510
    %s513 = sld [smem:[#allocation7 + $0x20]]
    %v514 = vstv %s513
    %v515 = vmul.f32 %v514, %v487
    %v516 = vmul.f32 %v514, %v488
    %v517 = vadd.f32 %v463, %v515
    %v518 = vadd.f32 %v464, %v516
    %s519 = sld [smem:[#allocation7 + $0x21]]
    %v520 = vstv %s519
    %v521 = vmul.f32 %v520, %v487
    %v522 = vmul.f32 %v520, %v488
    %v523 = vadd.f32 %v469, %v521
    %v524 = vadd.f32 %v470, %v522
    %s525 = sld [smem:[#allocation7 + $0x22]]
    %v526 = vstv %s525
    %v527 = vmul.f32 %v526, %v487
    %v528 = vmul.f32 %v526, %v488
    %v529 = vadd.f32 %v475, %v527
    %v530 = vadd.f32 %v476, %v528
    %531 = vrot.lane.b32.xlu0 %v92, 112
    %v532 = vpop.permute.xlu0 %531
    %533 = vrot.lane.b32.xlu0 %v93, 112
    %v534 = vpop.permute.xlu0 %533
    %v535 = vsel %vm484, %v532, %v534
    %v536 = vsel %vm484, %v534, %v532
    %v537 = vmul.f32 %v535, %v478
    %v538 = vmul.f32 %v536, %v479
    %s539 = sld [smem:[#allocation7 + $0x4d]]
    %v540 = vstv %s539
    %v541 = vmul.f32 %v540, %v537
    %v542 = vmul.f32 %v540, %v538
    %v543 = vadd.f32 %v493, %v541
    %v544 = vadd.f32 %v494, %v542
    %s545 = sld [smem:[#allocation7 + $0x4e]]
    %v546 = vstv %s545
    %v547 = vmul.f32 %v546, %v537
    %v548 = vmul.f32 %v546, %v538
    %v549 = vadd.f32 %v499, %v547
    %v550 = vadd.f32 %v500, %v548
    %s551 = sld [smem:[#allocation7 + $0x4f]]
    %v552 = vstv %s551
    %v553 = vmul.f32 %v552, %v537
    %v554 = vmul.f32 %v552, %v538
    %v555 = vadd.f32 %v505, %v553
    %v556 = vadd.f32 %v506, %v554
    %s557 = sld [smem:[#allocation7 + $0x50]]
    %v558 = vstv %s557
    %v559 = vmul.f32 %v558, %v537
    %v560 = vmul.f32 %v558, %v538
    %v561 = vadd.f32 %v511, %v559
    %v562 = vadd.f32 %v512, %v560
    %s563 = sld [smem:[#allocation7 + $0x51]]
    %v564 = vstv %s563
    %v565 = vmul.f32 %v564, %v537
    %v566 = vmul.f32 %v564, %v538
    %v567 = vadd.f32 %v517, %v565
    %v568 = vadd.f32 %v518, %v566
    %s569 = sld [smem:[#allocation7 + $0x52]]
    %v570 = vstv %s569
    %v571 = vmul.f32 %v570, %v537
    %v572 = vmul.f32 %v570, %v538
    %v573 = vadd.f32 %v523, %v571
    %v574 = vadd.f32 %v524, %v572
    %s575 = sld [smem:[#allocation7 + $0x53]]
    %v576 = vstv %s575
    %v577 = vmul.f32 %v576, %v537
    %v578 = vmul.f32 %v576, %v538
    %v579 = vadd.f32 %v529, %v577
    %v580 = vadd.f32 %v530, %v578
    %s581 = scalar_lea.vmem [#allocation8], 80
    %v582 = vld [vmem:[%s581] sm:$0xff]
    %v583 = vld [vmem:[%s581 + $0x8] sm:$0xff]
    %584 = vrot.lane.b32.xlu0 %v90, 96
    %v585 = vpop.permute.xlu0 %584
    %586 = vrot.lane.b32.xlu0 %v91, 96
    %v587 = vpop.permute.xlu0 %586
    %vm588 = vcmp.lt.s32.totalorder %v101, 96
    %v589 = vsel %vm588, %v585, %v587
    %v590 = vsel %vm588, %v587, %v585
    %v591 = vmul.f32 %v589, %v582
    %v592 = vmul.f32 %v590, %v583
    %s593 = sld [smem:[#allocation7 + $0x23]]
    %v594 = vstv %s593
    %v595 = vmul.f32 %v594, %v591
    %v596 = vmul.f32 %v594, %v592
    %v597 = vadd.f32 %v543, %v595
    %v598 = vadd.f32 %v544, %v596
    %s599 = sld [smem:[#allocation7 + $0x24]]
    %v600 = vstv %s599
    %v601 = vmul.f32 %v600, %v591
    %v602 = vmul.f32 %v600, %v592
    %v603 = vadd.f32 %v549, %v601
    %v604 = vadd.f32 %v550, %v602
    %s605 = sld [smem:[#allocation7 + $0x25]]
    %v606 = vstv %s605
    %v607 = vmul.f32 %v606, %v591
    %v608 = vmul.f32 %v606, %v592
    %v609 = vadd.f32 %v555, %v607
    %v610 = vadd.f32 %v556, %v608
    %s611 = sld [smem:[#allocation7 + $0x26]]
    %v612 = vstv %s611
    %v613 = vmul.f32 %v612, %v591
    %v614 = vmul.f32 %v612, %v592
    %v615 = vadd.f32 %v561, %v613
    %v616 = vadd.f32 %v562, %v614
    %s617 = sld [smem:[#allocation7 + $0x27]]
    %v618 = vstv %s617
    %v619 = vmul.f32 %v618, %v591
    %v620 = vmul.f32 %v618, %v592
    %v621 = vadd.f32 %v567, %v619
    %v622 = vadd.f32 %v568, %v620
    %s623 = sld [smem:[#allocation7 + $0x28]]
    %v624 = vstv %s623
    %v625 = vmul.f32 %v624, %v591
    %v626 = vmul.f32 %v624, %v592
    %v627 = vadd.f32 %v573, %v625
    %v628 = vadd.f32 %v574, %v626
    %s629 = sld [smem:[#allocation7 + $0x29]]
    %v630 = vstv %s629
    %v631 = vmul.f32 %v630, %v591
    %v632 = vmul.f32 %v630, %v592
    %v633 = vadd.f32 %v579, %v631
    %v634 = vadd.f32 %v580, %v632
    %635 = vrot.lane.b32.xlu0 %v92, 96
    %v636 = vpop.permute.xlu0 %635
    %637 = vrot.lane.b32.xlu0 %v93, 96
    %v638 = vpop.permute.xlu0 %637
    %v639 = vsel %vm588, %v636, %v638
    %v640 = vsel %vm588, %v638, %v636
    %v641 = vmul.f32 %v639, %v582
    %v642 = vmul.f32 %v640, %v583
    %s643 = sld [smem:[#allocation7 + $0x54]]
    %v644 = vstv %s643
    %v645 = vmul.f32 %v644, %v641
    %v646 = vmul.f32 %v644, %v642
    %v647 = vadd.f32 %v597, %v645
    %v648 = vadd.f32 %v598, %v646
    %s649 = sld [smem:[#allocation7 + $0x55]]
    %v650 = vstv %s649
    %v651 = vmul.f32 %v650, %v641
    %v652 = vmul.f32 %v650, %v642
    %v653 = vadd.f32 %v603, %v651
    %v654 = vadd.f32 %v604, %v652
    %s655 = sld [smem:[#allocation7 + $0x56]]
    %v656 = vstv %s655
    %v657 = vmul.f32 %v656, %v641
    %v658 = vmul.f32 %v656, %v642
    %v659 = vadd.f32 %v609, %v657
    %v660 = vadd.f32 %v610, %v658
    %s661 = sld [smem:[#allocation7 + $0x57]]
    %v662 = vstv %s661
    %v663 = vmul.f32 %v662, %v641
    %v664 = vmul.f32 %v662, %v642
    %v665 = vadd.f32 %v615, %v663
    %v666 = vadd.f32 %v616, %v664
    %s667 = sld [smem:[#allocation7 + $0x58]]
    %v668 = vstv %s667
    %v669 = vmul.f32 %v668, %v641
    %v670 = vmul.f32 %v668, %v642
    %v671 = vadd.f32 %v621, %v669
    %v672 = vadd.f32 %v622, %v670
    %s673 = sld [smem:[#allocation7 + $0x59]]
    %v674 = vstv %s673
    %v675 = vmul.f32 %v674, %v641
    %v676 = vmul.f32 %v674, %v642
    %v677 = vadd.f32 %v627, %v675
    %v678 = vadd.f32 %v628, %v676
    %s679 = sld [smem:[#allocation7 + $0x5a]]
    %v680 = vstv %s679
    %v681 = vmul.f32 %v680, %v641
    %v682 = vmul.f32 %v680, %v642
    %v683 = vadd.f32 %v633, %v681
    %v684 = vadd.f32 %v634, %v682
    %s685 = scalar_lea.vmem [#allocation8], 96
    %v686 = vld [vmem:[%s685] sm:$0xff]
    %v687 = vld [vmem:[%s685 + $0x8] sm:$0xff]
    %688 = vrot.lane.b32.xlu0 %v90, 80
    %v689 = vpop.permute.xlu0 %688
    %690 = vrot.lane.b32.xlu0 %v91, 80
    %v691 = vpop.permute.xlu0 %690
    %vm692 = vcmp.lt.s32.totalorder %v101, 80
    %v693 = vsel %vm692, %v689, %v691
    %v694 = vsel %vm692, %v691, %v689
    %v695 = vmul.f32 %v693, %v686
    %v696 = vmul.f32 %v694, %v687
    %s697 = sld [smem:[#allocation7 + $0x2a]]
    %v698 = vstv %s697
    %v699 = vmul.f32 %v698, %v695
    %v700 = vmul.f32 %v698, %v696
    %v701 = vadd.f32 %v647, %v699
    %v702 = vadd.f32 %v648, %v700
    %s703 = sld [smem:[#allocation7 + $0x2b]]
    %v704 = vstv %s703
    %v705 = vmul.f32 %v704, %v695
    %v706 = vmul.f32 %v704, %v696
    %v707 = vadd.f32 %v653, %v705
    %v708 = vadd.f32 %v654, %v706
    %s709 = sld [smem:[#allocation7 + $0x2c]]
    %v710 = vstv %s709
    %v711 = vmul.f32 %v710, %v695
    %v712 = vmul.f32 %v710, %v696
    %v713 = vadd.f32 %v659, %v711
    %v714 = vadd.f32 %v660, %v712
    %s715 = sld [smem:[#allocation7 + $0x2d]]
    %v716 = vstv %s715
    %v717 = vmul.f32 %v716, %v695
    %v718 = vmul.f32 %v716, %v696
    %v719 = vadd.f32 %v665, %v717
    %v720 = vadd.f32 %v666, %v718
    %s721 = sld [smem:[#allocation7 + $0x2e]]
    %v722 = vstv %s721
    %v723 = vmul.f32 %v722, %v695
    %v724 = vmul.f32 %v722, %v696
    %v725 = vadd.f32 %v671, %v723
    %v726 = vadd.f32 %v672, %v724
    %s727 = sld [smem:[#allocation7 + $0x2f]]
    %v728 = vstv %s727
    %v729 = vmul.f32 %v728, %v695
    %v730 = vmul.f32 %v728, %v696
    %v731 = vadd.f32 %v677, %v729
    %v732 = vadd.f32 %v678, %v730
    %s733 = sld [smem:[#allocation7 + $0x30]]
    %v734 = vstv %s733
    %v735 = vmul.f32 %v734, %v695
    %v736 = vmul.f32 %v734, %v696
    %v737 = vadd.f32 %v683, %v735
    %v738 = vadd.f32 %v684, %v736
    %739 = vrot.lane.b32.xlu0 %v92, 80
    %v740 = vpop.permute.xlu0 %739
    %741 = vrot.lane.b32.xlu0 %v93, 80
    %v742 = vpop.permute.xlu0 %741
    %v743 = vsel %vm692, %v740, %v742
    %v744 = vsel %vm692, %v742, %v740
    %v745 = vmul.f32 %v743, %v686
    %v746 = vmul.f32 %v744, %v687
    %s747 = sld [smem:[#allocation7 + $0x5b]]
    %v748 = vstv %s747
    %v749 = vmul.f32 %v748, %v745
    %v750 = vmul.f32 %v748, %v746
    %v751 = vadd.f32 %v701, %v749
    %v752 = vadd.f32 %v702, %v750
    %s753 = sld [smem:[#allocation7 + $0x5c]]
    %v754 = vstv %s753
    %v755 = vmul.f32 %v754, %v745
    %v756 = vmul.f32 %v754, %v746
    %v757 = vadd.f32 %v707, %v755
    %v758 = vadd.f32 %v708, %v756
    %s759 = sld [smem:[#allocation7 + $0x5d]]
    %v760 = vstv %s759
    %v761 = vmul.f32 %v760, %v745
    %v762 = vmul.f32 %v760, %v746
    %v763 = vadd.f32 %v713, %v761
    %v764 = vadd.f32 %v714, %v762
    %s765 = sld [smem:[#allocation7 + $0x5e]]
    %v766 = vstv %s765
    %v767 = vmul.f32 %v766, %v745
    %v768 = vmul.f32 %v766, %v746
    %v769 = vadd.f32 %v719, %v767
    %v770 = vadd.f32 %v720, %v768
    %s771 = sld [smem:[#allocation7 + $0x5f]]
    %v772 = vstv %s771
    %v773 = vmul.f32 %v772, %v745
    %v774 = vmul.f32 %v772, %v746
    %v775 = vadd.f32 %v725, %v773
    %v776 = vadd.f32 %v726, %v774
    %s777 = sld [smem:[#allocation7 + $0x60]]
    %v778 = vstv %s777
    %v779 = vmul.f32 %v778, %v745
    %v780 = vmul.f32 %v778, %v746
    %v781 = vadd.f32 %v731, %v779
    %v782 = vadd.f32 %v732, %v780
    %s783 = sld [smem:[#allocation7 + $0x61]]
    %v784 = vstv %s783
    %v785 = vmul.f32 %v784, %v745
    %v786 = vmul.f32 %v784, %v746
    %v787 = vadd.f32 %v737, %v785
    %v788 = vadd.f32 %v738, %v786
    %789 = vrot.lane.b32.xlu0 %v751, 3
    %v790 = vpop.permute.xlu0 %789
    %791 = vrot.lane.b32.xlu0 %v752, 3
    %v792 = vpop.permute.xlu0 %791
    %vm793 = vcmp.lt.s32.totalorder %v101, 3
    %v794 = vsel %vm793, %v790, %v792
    %v795 = vsel %vm793, %v792, %v790
    %v796 = vld [vmem:[#allocation10] sm:$0xff]
    %v797 = vld [vmem:[#allocation10 + $0x8] sm:$0xff]
    %v798 = vmul.f32 %v795, %v796
    %v799 = vmul.f32 %v794, %v797
    %800 = vrot.lane.b32.xlu0 %v757, 2
    %v801 = vpop.permute.xlu0 %800
    %802 = vrot.lane.b32.xlu0 %v758, 2
    %v803 = vpop.permute.xlu0 %802
    %vm804 = vcmp.lt.s32.totalorder %v101, 2
    %v805 = vsel %vm804, %v801, %v803
    %v806 = vsel %vm804, %v803, %v801
    %s807 = scalar_lea.vmem [#allocation10], 16
    %v808 = vld [vmem:[%s807] sm:$0xff]
    %v809 = vld [vmem:[%s807 + $0x8] sm:$0xff]
    %v810 = vmul.f32 %v806, %v808
    %v811 = vmul.f32 %v805, %v809
    %v812 = vadd.f32 %v798, %v810
    %v813 = vadd.f32 %v799, %v811
    %814 = vrot.lane.b32.xlu0 %v763, 1
    %v815 = vpop.permute.xlu0 %814
    %816 = vrot.lane.b32.xlu0 %v764, 1
    %v817 = vpop.permute.xlu0 %816
    %vm818 = vcmp.lt.s32.totalorder %v101, 1
    %v819 = vsel %vm818, %v815, %v817
    %v820 = vsel %vm818, %v817, %v815
    %s821 = scalar_lea.vmem [#allocation10], 32
    %v822 = vld [vmem:[%s821] sm:$0xff]
    %v823 = vld [vmem:[%s821 + $0x8] sm:$0xff]
    %v824 = vmul.f32 %v820, %v822
    %v825 = vmul.f32 %v819, %v823
    %v826 = vadd.f32 %v812, %v824
    %v827 = vadd.f32 %v813, %v825
    %v828 = vadd.f32 %v826, %v769
    %v829 = vadd.f32 %v827, %v770
    %830 = vrot.lane.b32.xlu0 %v775, 127
    %v831 = vpop.permute.xlu0 %830
    %832 = vrot.lane.b32.xlu0 %v776, 127
    %v833 = vpop.permute.xlu0 %832
    %vm834 = vcmp.lt.s32.totalorder %v101, 127
    %v835 = vsel %vm834, %v831, %v833
    %v836 = vsel %vm834, %v833, %v831
    %s837 = scalar_lea.vmem [#allocation10], 64
    %v838 = vld [vmem:[%s837] sm:$0xff]
    %v839 = vld [vmem:[%s837 + $0x8] sm:$0xff]
    %v840 = vmul.f32 %v835, %v838
    %v841 = vmul.f32 %v836, %v839
    %v842 = vadd.f32 %v828, %v840
    %v843 = vadd.f32 %v829, %v841
    %844 = vrot.lane.b32.xlu0 %v781, 126
    %v845 = vpop.permute.xlu0 %844
    %846 = vrot.lane.b32.xlu0 %v782, 126
    %v847 = vpop.permute.xlu0 %846
    %vm848 = vcmp.lt.s32.totalorder %v101, 126
    %v849 = vsel %vm848, %v845, %v847
    %v850 = vsel %vm848, %v847, %v845
    %s851 = scalar_lea.vmem [#allocation10], 80
    %v852 = vld [vmem:[%s851] sm:$0xff]
    %v853 = vld [vmem:[%s851 + $0x8] sm:$0xff]
    %v854 = vmul.f32 %v849, %v852
    %v855 = vmul.f32 %v850, %v853
    %v856 = vadd.f32 %v842, %v854
    %v857 = vadd.f32 %v843, %v855
    %858 = vrot.lane.b32.xlu0 %v787, 125
    %v859 = vpop.permute.xlu0 %858
    %860 = vrot.lane.b32.xlu0 %v788, 125
    %v861 = vpop.permute.xlu0 %860
    %vm862 = vcmp.lt.s32.totalorder %v101, 125
    %v863 = vsel %vm862, %v859, %v861
    %v864 = vsel %vm862, %v861, %v859
    %s865 = scalar_lea.vmem [#allocation10], 96
    %v866 = vld [vmem:[%s865] sm:$0xff]
    %v867 = vld [vmem:[%s865 + $0x8] sm:$0xff]
    %v868 = vmul.f32 %v863, %v866
    %v869 = vmul.f32 %v864, %v867
    %v870 = vadd.f32 %v856, %v868
    %v871 = vadd.f32 %v857, %v869
    %s872 = sld [smem:[#allocation2]]
    %v873 = vstv %s872
    %v874 = vadd.f32 %v870, %v873
    %v875 = vadd.f32 %v871, %v873
    %v876 = vsub.f32 0.0, %v874
    %v877 = vsub.f32 0.0, %v875
    %v878 = vmul.f32 %v876, 1.442695
    %v879 = vpow.pop %v878
    %v880 = vmul.f32 %v877, 1.442695
    %v881 = vpow.pop %v880
    %v882 = vadd.f32 %v879, 1.0
    %v883 = vadd.f32 %v881, 1.0
    %v884 = vrcp.pop %v882
    %v885 = vrcp.pop %v883
    %886 = vst [vmem:[#allocation11] sm:$0xff] %v884
    %887 = vst [vmem:[#allocation11 + $0x8] sm:$0xff] %v885
    // Predicated region
    $region38: #{tpu_custom_call.1} parent=1 // pred_check
      _
    $region39: #{tpu_custom_call.1} parent=1 // pred_check_branch
      %889 = sbr.rel (0) target = $region41
    $region40: #{tpu_custom_call.1} parent=1 // pred_region
      %s891 = ssub.s32 256, 256
      %892 = vsyncadd [#allocation5], %s891
      %s894 = sshll.u32 [#allocation11], 4
      %s895 = int_to_ptr.vmem [resolvable:$true] %s894
      %897 = dma.vmem_to_hbm [thread:$0]  %s895, 256, %s5, [#allocation5]
    $region41: #{tpu_custom_call.1} parent=1 // pred_fallthru
      _
    // Predicated region
    $region42: #{tpu_custom_call.1} parent=1 // pred_check
      _
    $region43: #{tpu_custom_call.1} parent=1 // pred_check_branch
      %899 = sbr.rel (0) target = $region45
    $region44: #{tpu_custom_call.1} parent=1 // pred_region
      %900 = dma.done [#allocation5], 256
    $region45: #{tpu_custom_call.1} parent=1 // pred_fallthru
      _
    %901 = vsyncpa [#allocation4], 1
    %902 = vsyncpa [#allocation9], 1
    %903 = vsyncpa [#allocation5], 1
    %904 = vsyncpa [#allocation6], 1

</llo_original>
